<compile_context>
chip_gen: v7x
topology: tpu7x:2x2x1
jax: 0.10.0
libtpu: 0.0.40
codegen_flags: <defaults>
</compile_context>

<pallas_src>
import functools

import jax
import jax.numpy as jnp
from jax.experimental import pallas as pl
from jax.experimental.pallas import tpu as pltpu

LN_EPS = 1e-5
MASK_VALUE = -1e9  # large finite; exp(mask - rowmax) underflows to exactly 0


def _layer_norm(x, g, b):
    mu = jnp.mean(x, axis=-1, keepdims=True)
    var = jnp.mean((x - mu) ** 2, axis=-1, keepdims=True)
    return (x - mu) * jax.lax.rsqrt(var + LN_EPS) * g + b


def clip_stack_kernel(x_emb_ref,
                      ln1_g_ref, ln1_b_ref, w_qkv_ref, b_qkv_ref, wo_ref, bo_ref,
                      ln2_g_ref, ln2_b_ref, w1_ref, b1_ref, w2_ref, b2_ref,
                      fin_g_ref, fin_b_ref,
                      o_ref, *, num_heads):
    """Full CLIP text-encoder stack; grid = (batch, layer), layer innermost.

    The output block (index_map ignores the layer axis) doubles as the resident
    activation carrier in VMEM across layer iterations.
    """
    layer = pl.program_id(1)
    n_layers = pl.num_programs(1)

    # Initialize the resident activation from the embeddings at layer 0.
    @pl.when(layer == 0)
    def _():
        o_ref[0] = x_emb_ref[0]

    x = o_ref[0]                       # (S, D) f32, carried across layers
    S, D = x.shape
    H = num_heads
    hd = D // H
    scale = hd ** -0.5
    wdt = w_qkv_ref.dtype              # bf16 compute dtype for MXU

    # ---- self-attention block (pre-LN, fused QKV) ----
    h = _layer_norm(x, ln1_g_ref[0], ln1_b_ref[0]).astype(wdt)
    qkv = jnp.dot(h, w_qkv_ref[0], preferred_element_type=jnp.float32) + b_qkv_ref[0]
    q = qkv[:, :D] * scale
    k = qkv[:, D:2 * D]
    v = qkv[:, 2 * D:]

    # Head-major layout: one relayout per tensor instead of H lane slices.
    q3 = q.reshape(S, H, hd).transpose(1, 0, 2).astype(wdt)   # (H, S, hd)
    k3 = k.reshape(S, H, hd).transpose(1, 0, 2).astype(wdt)   # (H, S, hd)
    v3 = v.reshape(S, H, hd).transpose(1, 0, 2).astype(wdt)   # (H, S, hd)

    # Batched scores over heads; contract head_dim, no explicit k transpose.
    s = jax.lax.dot_general(q3, k3, (((2,), (2,)), ((0,), (0,))),
                            preferred_element_type=jnp.float32)   # (H, S, S)

    # In-kernel causal mask.
    row = jax.lax.broadcasted_iota(jnp.int32, (S, S), 0)
    col = jax.lax.broadcasted_iota(jnp.int32, (S, S), 1)
    causal = (col <= row)[None, :, :]
    s = jnp.where(causal, s, jnp.float32(MASK_VALUE))

    m = jnp.max(s, axis=-1, keepdims=True)
    p = jnp.exp(s - m)
    denom = jnp.sum(p, axis=-1, keepdims=True)
    p = p * pl.reciprocal(denom, approx=True)                 # EUP divide

    ctx = jax.lax.dot_general(p.astype(wdt), v3, (((2,), (1,)), ((0,), (0,))),
                              preferred_element_type=jnp.float32)  # (H, S, hd)
    ctx = ctx.transpose(1, 0, 2).reshape(S, D).astype(wdt)

    attn_out = jnp.dot(ctx, wo_ref[0], preferred_element_type=jnp.float32) + bo_ref[0]
    x = x + attn_out

    # ---- MLP block (pre-LN, quick_gelu) ----
    h = _layer_norm(x, ln2_g_ref[0], ln2_b_ref[0]).astype(wdt)
    h1 = jnp.dot(h, w1_ref[0], preferred_element_type=jnp.float32) + b1_ref[0]
    h1 = h1 * jax.nn.sigmoid(1.702 * h1)                       # quick_gelu
    h2 = jnp.dot(h1.astype(wdt), w2_ref[0], preferred_element_type=jnp.float32) + b2_ref[0]
    x = x + h2

    # Carry activation; on the last layer fold in the final LayerNorm.
    @pl.when(layer < n_layers - 1)
    def _():
        o_ref[0] = x

    @pl.when(layer == n_layers - 1)
    def _():
        o_ref[0] = _layer_norm(x, fin_g_ref[...], fin_b_ref[...])


def frozen_clip_text_forward(tokens, packed, num_heads):
    """tokens: int32 [B, S]. packed: stacked params (see pack_params).
    Returns last_hidden_state [B, S, D] (after final LayerNorm)."""
    B, S = tokens.shape
    D = packed["token_emb"].shape[1]
    L = packed["w_qkv"].shape[0]

    # Embedding gather = glue, in plain JAX.
    x = (packed["token_emb"][tokens] + packed["pos_emb"][None, :S, :]).astype(jnp.float32)

    weight_keys = ("ln1_g", "ln1_b", "w_qkv", "b_qkv", "wo", "bo",
                   "ln2_g", "ln2_b", "w1", "b1", "w2", "b2")
    weight_inputs = [packed[k] for k in weight_keys]

    def per_layer_spec(arr):
        # arr: (L, r, c); block = one layer's slab, indexed by the layer axis.
        return pl.BlockSpec((1,) + arr.shape[1:], lambda b, l: (l, 0, 0))

    in_specs = ([pl.BlockSpec((1, S, D), lambda b, l: (b, 0, 0))]
                + [per_layer_spec(w) for w in weight_inputs]
                + [pl.BlockSpec((1, D), lambda b, l: (0, 0)),
                   pl.BlockSpec((1, D), lambda b, l: (0, 0))])

    return pl.pallas_call(
        functools.partial(clip_stack_kernel, num_heads=num_heads),
        out_shape=jax.ShapeDtypeStruct((B, S, D), jnp.float32),
        grid=(B, L),
        in_specs=in_specs,
        # Output block ignores the layer axis -> stays resident in VMEM across
        # layers; written back to HBM once per batch element.
        out_specs=pl.BlockSpec((1, S, D), lambda b, l: (b, 0, 0)),
        compiler_params=pltpu.CompilerParams(
            dimension_semantics=("parallel", "arbitrary"),
            # Explicit scoped-VMEM budget: above 16/32 MiB defaults, below v7x's
            # 64 MiB physical VMEM (bf16 weights keep CLIP-L double-buffering
            # well inside this).
            vmem_limit_bytes=48 * 1024 * 1024,
        ),
    )(x, *weight_inputs, packed["final_ln_g"], packed["final_ln_b"])


# ----------------------- parameter packing -----------------------
def pack_params(params, weight_dtype=jnp.bfloat16):
    """Stack per-layer weights into [L, ...] arrays, fuse QKV, cast matmul
    weights to bf16, reshape 1-D params to lane-major (1, D)."""
    layers = params["layers"]

    def stack(f):
        return jnp.stack([f(lp) for lp in layers], axis=0)

    return {
        "token_emb": params["token_emb"],
        "pos_emb": params["pos_emb"],
        "ln1_g": stack(lambda lp: lp["ln1_g"].reshape(1, -1)),
        "ln1_b": stack(lambda lp: lp["ln1_b"].reshape(1, -1)),
        "w_qkv": stack(lambda lp: jnp.concatenate(
            [lp["wq"], lp["wk"], lp["wv"]], axis=1)).astype(weight_dtype),
        "b_qkv": stack(lambda lp: jnp.concatenate(
            [lp["bq"], lp["bk"], lp["bv"]]).reshape(1, -1)),
        "wo": stack(lambda lp: lp["wo"]).astype(weight_dtype),
        "bo": stack(lambda lp: lp["bo"].reshape(1, -1)),
        "ln2_g": stack(lambda lp: lp["ln2_g"].reshape(1, -1)),
        "ln2_b": stack(lambda lp: lp["ln2_b"].reshape(1, -1)),
        "w1": stack(lambda lp: lp["w1"]).astype(weight_dtype),
        "b1": stack(lambda lp: lp["b1"].reshape(1, -1)),
        "w2": stack(lambda lp: lp["w2"]).astype(weight_dtype),
        "b2": stack(lambda lp: lp["b2"].reshape(1, -1)),
        "final_ln_g": params["final_ln_g"].reshape(1, -1),
        "final_ln_b": params["final_ln_b"].reshape(1, -1),
    }


# ----------------------- pure-JAX reference (same precision policy) -----------------------
def _reference_forward(tokens, packed, num_heads):
    B, S = tokens.shape
    D = packed["token_emb"].shape[1]
    H = num_heads
    hd = D // H
    scale = hd ** -0.5
    wdt = packed["w_qkv"].dtype
    L = packed["w_qkv"].shape[0]

    x = (packed["token_emb"][tokens] + packed["pos_emb"][None, :S, :]).astype(jnp.float32)
    idx = jnp.arange(S)
    causal = (idx[None, :] <= idx[:, None])

    for l in range(L):
        h = _layer_norm(x, packed["ln1_g"][l], packed["ln1_b"][l]).astype(wdt)
        qkv = jnp.dot(h, packed["w_qkv"][l],
                      preferred_element_type=jnp.float32) + packed["b_qkv"][l]
        q = (qkv[..., :D] * scale).astype(wdt).reshape(B, S, H, hd)
        k = qkv[..., D:2 * D].astype(wdt).reshape(B, S, H, hd)
        v = qkv[..., 2 * D:].astype(wdt).reshape(B, S, H, hd)
        s = jnp.einsum("bqhd,bkhd->bhqk", q, k, preferred_element_type=jnp.float32)
        s = jnp.where(causal[None, None], s, jnp.float32(MASK_VALUE))
        m = jnp.max(s, axis=-1, keepdims=True)
        p = jnp.exp(s - m)
        p = p / jnp.sum(p, axis=-1, keepdims=True)
        ctx = jnp.einsum("bhqk,bkhd->bqhd", p.astype(wdt), v,
                         preferred_element_type=jnp.float32)
        ctx = ctx.reshape(B, S, D).astype(wdt)
        x = x + jnp.dot(ctx, packed["wo"][l],
                        preferred_element_type=jnp.float32) + packed["bo"][l]
        h = _layer_norm(x, packed["ln2_g"][l], packed["ln2_b"][l]).astype(wdt)
        h1 = jnp.dot(h, packed["w1"][l],
                     preferred_element_type=jnp.float32) + packed["b1"][l]
        h1 = h1 * jax.nn.sigmoid(1.702 * h1)
        x = x + jnp.dot(h1.astype(wdt), packed["w2"][l],
                        preferred_element_type=jnp.float32) + packed["b2"][l]

    return _layer_norm(x, packed["final_ln_g"], packed["final_ln_b"])


# ----------------------- deterministic synthetic parameters -----------------------
def init_params(key, vocab, max_len, d_model, n_layers, d_mlp):
    keys = iter(jax.random.split(key, 4 + n_layers * 6))
    p = {
        "token_emb": 0.02 * jax.random.normal(next(keys), (vocab, d_model), jnp.float32),
        "pos_emb": 0.02 * jax.random.normal(next(keys), (max_len, d_model), jnp.float32),
        "final_ln_g": jnp.ones((d_model,), jnp.float32),
        "final_ln_b": jnp.zeros((d_model,), jnp.float32),
        "layers": [],
    }
    for _ in range(n_layers):
        lp = {
            "ln1_g": jnp.ones((d_model,), jnp.float32),
            "ln1_b": jnp.zeros((d_model,), jnp.float32),
            "wq": 0.02 * jax.random.normal(next(keys), (d_model, d_model), jnp.float32),
            "bq": jnp.zeros((d_model,), jnp.float32),
            "wk": 0.02 * jax.random.normal(next(keys), (d_model, d_model), jnp.float32),
            "bk": jnp.zeros((d_model,), jnp.float32),
            "wv": 0.02 * jax.random.normal(next(keys), (d_model, d_model), jnp.float32),
            "bv": jnp.zeros((d_model,), jnp.float32),
            "wo": 0.02 * jax.random.normal(next(keys), (d_model, d_model), jnp.float32),
            "bo": jnp.zeros((d_model,), jnp.float32),
            "ln2_g": jnp.ones((d_model,), jnp.float32),
            "ln2_b": jnp.zeros((d_model,), jnp.float32),
            "w1": 0.02 * jax.random.normal(next(keys), (d_model, d_mlp), jnp.float32),
            "b1": jnp.zeros((d_mlp,), jnp.float32),
            "w2": 0.02 * jax.random.normal(next(keys), (d_mlp, d_model), jnp.float32),
            "b2": jnp.zeros((d_model,), jnp.float32),
        }
        p["layers"].append(lp)
    return p


if __name__ == "__main__":
    # Small synthetic config (CLIP text encoder structure at toy size).
    B, S = 2, 8           # batch, seq (stands in for max_length=77)
    D, H = 64, 4          # hidden, heads
    N_LAYERS = 2
    D_MLP = 4 * D
    VOCAB = 1000

    key = jax.random.PRNGKey(0)
    k_tok, k_par = jax.random.split(key)
    tokens = jax.random.randint(k_tok, (B, S), 0, VOCAB, dtype=jnp.int32)
    params = init_params(k_par, VOCAB, S, D, N_LAYERS, D_MLP)
    packed = pack_params(params, weight_dtype=jnp.bfloat16)

    z = frozen_clip_text_forward(tokens, packed, H)
    z = jax.block_until_ready(z)

    z_ref = _reference_forward(tokens, packed, H)
    assert z.shape == (B, S, D)
    # Same bf16/f32 precision policy as the kernel; differences are only MXU
    # accumulation order and the approximate EUP reciprocal in the softmax.
    assert jnp.allclose(z, z_ref, atol=2e-2, rtol=2e-2), "mismatch vs JAX reference"

    print("KERNEL_OK")
</pallas_src>

<mosaic_0001>
module attributes {stable_mosaic.version = 11 : i64} {
  func.func @clip_stack_kernel(%arg0: i32, %arg1: i32, %arg2: memref<1x8x64xf32, #tpu.memory_space<vmem>>, %arg3: memref<1x1x64xf32, #tpu.memory_space<vmem>>, %arg4: memref<1x1x64xf32, #tpu.memory_space<vmem>>, %arg5: memref<1x64x192xbf16, #tpu.memory_space<vmem>>, %arg6: memref<1x1x192xf32, #tpu.memory_space<vmem>>, %arg7: memref<1x64x64xbf16, #tpu.memory_space<vmem>>, %arg8: memref<1x1x64xf32, #tpu.memory_space<vmem>>, %arg9: memref<1x1x64xf32, #tpu.memory_space<vmem>>, %arg10: memref<1x1x64xf32, #tpu.memory_space<vmem>>, %arg11: memref<1x64x256xbf16, #tpu.memory_space<vmem>>, %arg12: memref<1x1x256xf32, #tpu.memory_space<vmem>>, %arg13: memref<1x256x64xbf16, #tpu.memory_space<vmem>>, %arg14: memref<1x1x64xf32, #tpu.memory_space<vmem>>, %arg15: memref<1x64xf32, #tpu.memory_space<vmem>>, %arg16: memref<1x64xf32, #tpu.memory_space<vmem>>, %arg17: memref<1x8x64xf32, #tpu.memory_space<vmem>>) attributes {dimension_semantics = [#tpu.dimension_semantics<parallel>, #tpu.dimension_semantics<arbitrary>], iteration_bounds = array<i64: 2, 2>, scalar_prefetch = 0 : i64, scratch_operands = 0 : i64, tpu.core_type = #tpu.core_type<tc>, window_params = [{transform_indices = @transform_0, window_bounds = array<i64: 1, 8, 64>}, {transform_indices = @transform_1, window_bounds = array<i64: 1, 1, 64>}, {transform_indices = @transform_2, window_bounds = array<i64: 1, 1, 64>}, {transform_indices = @transform_3, window_bounds = array<i64: 1, 64, 192>}, {transform_indices = @transform_4, window_bounds = array<i64: 1, 1, 192>}, {transform_indices = @transform_5, window_bounds = array<i64: 1, 64, 64>}, {transform_indices = @transform_6, window_bounds = array<i64: 1, 1, 64>}, {transform_indices = @transform_7, window_bounds = array<i64: 1, 1, 64>}, {transform_indices = @transform_8, window_bounds = array<i64: 1, 1, 64>}, {transform_indices = @transform_9, window_bounds = array<i64: 1, 64, 256>}, {transform_indices = @transform_10, window_bounds = array<i64: 1, 1, 256>}, {transform_indices = @transform_11, window_bounds = array<i64: 1, 256, 64>}, {transform_indices = @transform_12, window_bounds = array<i64: 1, 1, 64>}, {pipeline_mode = #tpu.pipeline_mode<synchronous>, transform_indices = @transform_13, window_bounds = array<i64: 1, 64>}, {pipeline_mode = #tpu.pipeline_mode<synchronous>, transform_indices = @transform_14, window_bounds = array<i64: 1, 64>}, {transform_indices = @transform_15, window_bounds = array<i64: 1, 8, 64>}]} {
    %c0_i32 = arith.constant 0 : i32
    %0 = arith.cmpi eq, %arg1, %c0_i32 : i32
    %1 = arith.extui %0 : i1 to i32
    %c0_i32_0 = arith.constant 0 : i32
    %2 = arith.cmpi ne, %1, %c0_i32_0 : i32
    scf.if %2 {
      %c0_63 = arith.constant 0 : index
      %c0_64 = arith.constant 0 : index
      %c0_65 = arith.constant 0 : index
      %142 = vector.load %arg2[%c0_63, %c0_64, %c0_65] : memref<1x8x64xf32, #tpu.memory_space<vmem>>, vector<1x8x64xf32>
      %143 = vector.shape_cast %142 : vector<1x8x64xf32> to vector<8x64xf32>
      %c0_66 = arith.constant 0 : index
      %c0_67 = arith.constant 0 : index
      %c0_68 = arith.constant 0 : index
      %144 = vector.load %arg17[%c0_66, %c0_67, %c0_68] : memref<1x8x64xf32, #tpu.memory_space<vmem>>, vector<1x8x64xf32>
      %145 = vector.shape_cast %144 : vector<1x8x64xf32> to vector<8x64xf32>
      %146 = vector.shape_cast %143 : vector<8x64xf32> to vector<1x8x64xf32>
      tpu.vector_store %arg17[%c0_66, %c0_67, %c0_68], %146 {strides = array<i32>} : memref<1x8x64xf32, #tpu.memory_space<vmem>>, vector<1x8x64xf32>,
    } else {
    }
    %c0 = arith.constant 0 : index
    %c0_1 = arith.constant 0 : index
    %c0_2 = arith.constant 0 : index
    %3 = vector.load %arg17[%c0, %c0_1, %c0_2] : memref<1x8x64xf32, #tpu.memory_space<vmem>>, vector<1x8x64xf32>
    %4 = vector.shape_cast %3 : vector<1x8x64xf32> to vector<8x64xf32>
    %c0_3 = arith.constant 0 : index
    %c0_4 = arith.constant 0 : index
    %c0_5 = arith.constant 0 : index
    %5 = vector.load %arg3[%c0_3, %c0_4, %c0_5] : memref<1x1x64xf32, #tpu.memory_space<vmem>>, vector<1x1x64xf32>
    %6 = vector.shape_cast %5 : vector<1x1x64xf32> to vector<1x64xf32>
    %c0_6 = arith.constant 0 : index
    %c0_7 = arith.constant 0 : index
    %c0_8 = arith.constant 0 : index
    %7 = vector.load %arg4[%c0_6, %c0_7, %c0_8] : memref<1x1x64xf32, #tpu.memory_space<vmem>>, vector<1x1x64xf32>
    %8 = vector.shape_cast %7 : vector<1x1x64xf32> to vector<1x64xf32>
    %cst = arith.constant dense<0.000000e+00> : vector<8xf32>
    %9 = vector.multi_reduction <add>, %4, %cst [1] : vector<8x64xf32> to vector<8xf32>
    %10 = vector.shape_cast %9 : vector<8xf32> to vector<8x1xf32>
    %cst_9 = arith.constant 6.400000e+01 : f32
    %11 = vector.broadcast %cst_9 : f32 to vector<8x1xf32>
    %12 = arith.divf %10, %11 : vector<8x1xf32>
    %13 = vector.broadcast %12 : vector<8x1xf32> to vector<8x64xf32>
    %14 = arith.subf %4, %13 : vector<8x64xf32>
    %15 = arith.mulf %14, %14 : vector<8x64xf32>
    %cst_10 = arith.constant dense<0.000000e+00> : vector<8xf32>
    %16 = vector.multi_reduction <add>, %15, %cst_10 [1] : vector<8x64xf32> to vector<8xf32>
    %17 = vector.shape_cast %16 : vector<8xf32> to vector<8x1xf32>
    %cst_11 = arith.constant 6.400000e+01 : f32
    %18 = vector.broadcast %cst_11 : f32 to vector<8x1xf32>
    %19 = arith.divf %17, %18 : vector<8x1xf32>
    %20 = vector.broadcast %12 : vector<8x1xf32> to vector<8x64xf32>
    %21 = arith.subf %4, %20 : vector<8x64xf32>
    %cst_12 = arith.constant 9.99999974E-6 : f32
    %22 = vector.broadcast %cst_12 : f32 to vector<8x1xf32>
    %23 = arith.addf %19, %22 : vector<8x1xf32>
    %24 = math.rsqrt %23 : vector<8x1xf32>
    %25 = vector.broadcast %24 : vector<8x1xf32> to vector<8x64xf32>
    %26 = arith.mulf %21, %25 : vector<8x64xf32>
    %27 = vector.broadcast %6 : vector<1x64xf32> to vector<8x64xf32>
    %28 = arith.mulf %26, %27 : vector<8x64xf32>
    %29 = vector.broadcast %8 : vector<1x64xf32> to vector<8x64xf32>
    %30 = arith.addf %28, %29 : vector<8x64xf32>
    %31 = arith.truncf %30 : vector<8x64xf32> to vector<8x64xbf16>
    %c0_13 = arith.constant 0 : index
    %c0_14 = arith.constant 0 : index
    %c0_15 = arith.constant 0 : index
    %32 = vector.load %arg5[%c0_13, %c0_14, %c0_15] : memref<1x64x192xbf16, #tpu.memory_space<vmem>>, vector<1x64x192xbf16>
    %33 = vector.shape_cast %32 : vector<1x64x192xbf16> to vector<64x192xbf16>
    %cst_16 = arith.constant dense<0.000000e+00> : vector<8x192xf32>
    %34 = tpu.matmul %31, %33, %cst_16 {dimension_numbers = #tpu.dot_dimension_numbers<[1], [0], [0], [1], [0, 0, 1, 1], [], []>} : vector<8x64xbf16>, vector<64x192xbf16>, vector<8x192xf32> -> vector<8x192xf32>
    %c0_17 = arith.constant 0 : index
    %c0_18 = arith.constant 0 : index
    %c0_19 = arith.constant 0 : index
    %35 = vector.load %arg6[%c0_17, %c0_18, %c0_19] : memref<1x1x192xf32, #tpu.memory_space<vmem>>, vector<1x1x192xf32>
    %36 = vector.shape_cast %35 : vector<1x1x192xf32> to vector<1x192xf32>
    %37 = vector.broadcast %36 : vector<1x192xf32> to vector<8x192xf32>
    %38 = arith.addf %34, %37 : vector<8x192xf32>
    %39 = vector.extract_strided_slice %38 {offsets = [0, 0], sizes = [8, 64], strides = [1, 1]} : vector<8x192xf32> to vector<8x64xf32>
    %cst_20 = arith.constant 2.500000e-01 : f32
    %40 = vector.broadcast %cst_20 : f32 to vector<8x64xf32>
    %41 = arith.mulf %39, %40 : vector<8x64xf32>
    %42 = vector.extract_strided_slice %38 {offsets = [0, 64], sizes = [8, 64], strides = [1, 1]} : vector<8x192xf32> to vector<8x64xf32>
    %43 = vector.extract_strided_slice %38 {offsets = [0, 128], sizes = [8, 64], strides = [1, 1]} : vector<8x192xf32> to vector<8x64xf32>
    %44 = vector.shape_cast %41 : vector<8x64xf32> to vector<8x4x16xf32>
    %45 = tpu.transpose %44, [1, 0, 2] : vector<8x4x16xf32> -> vector<4x8x16xf32>
    %46 = arith.truncf %45 : vector<4x8x16xf32> to vector<4x8x16xbf16>
    %47 = vector.shape_cast %42 : vector<8x64xf32> to vector<8x4x16xf32>
    %48 = tpu.transpose %47, [1, 0, 2] : vector<8x4x16xf32> -> vector<4x8x16xf32>
    %49 = arith.truncf %48 : vector<4x8x16xf32> to vector<4x8x16xbf16>
    %50 = vector.shape_cast %43 : vector<8x64xf32> to vector<8x4x16xf32>
    %51 = tpu.transpose %50, [1, 0, 2] : vector<8x4x16xf32> -> vector<4x8x16xf32>
    %52 = arith.truncf %51 : vector<4x8x16xf32> to vector<4x8x16xbf16>
    %cst_21 = arith.constant dense<0.000000e+00> : vector<4x8x8xf32>
    %53 = tpu.matmul %46, %49, %cst_21 {dimension_numbers = #tpu.dot_dimension_numbers<[2], [2], [1], [1], [0, 0, 0, 1, 1, 1], [0], [0]>} : vector<4x8x16xbf16>, vector<4x8x16xbf16>, vector<4x8x8xf32> -> vector<4x8x8xf32>
    %54 = tpu.iota {dimensions = array<i32: 0>} : vector<8x8xi32>
    %55 = tpu.iota {dimensions = array<i32: 1>} : vector<8x8xi32>
    %56 = arith.cmpi sle, %55, %54 : vector<8x8xi32>
    %57 = vector.shape_cast %56 : vector<8x8xi1> to vector<1x8x8xi1>
    %cst_22 = arith.constant -1.000000e+09 : f32
    %58 = vector.shape_cast %57 : vector<1x8x8xi1> to vector<1x8x8xi1>
    %59 = vector.broadcast %58 : vector<1x8x8xi1> to vector<4x8x8xi1>
    %60 = vector.broadcast %cst_22 : f32 to vector<4x8x8xf32>
    %61 = arith.select %59, %53, %60 : vector<4x8x8xi1>, vector<4x8x8xf32>
    %cst_23 = arith.constant dense<0xFF800000> : vector<4x8xf32>
    %62 = vector.multi_reduction <maximumf>, %61, %cst_23 [2] : vector<4x8x8xf32> to vector<4x8xf32>
    %63 = vector.shape_cast %62 : vector<4x8xf32> to vector<4x8x1xf32>
    %64 = vector.broadcast %63 : vector<4x8x1xf32> to vector<4x8x8xf32>
    %65 = arith.subf %61, %64 : vector<4x8x8xf32>
    %66 = math.exp %65 : vector<4x8x8xf32>
    %cst_24 = arith.constant dense<0.000000e+00> : vector<4x8xf32>
    %67 = vector.multi_reduction <add>, %66, %cst_24 [2] : vector<4x8x8xf32> to vector<4x8xf32>
    %68 = vector.shape_cast %67 : vector<4x8xf32> to vector<4x8x1xf32>
    %69 = tpu.reciprocal %68 {approx = true} : vector<4x8x1xf32> -> vector<4x8x1xf32>
    %70 = vector.broadcast %69 : vector<4x8x1xf32> to vector<4x8x8xf32>
    %71 = arith.mulf %66, %70 : vector<4x8x8xf32>
    %72 = arith.truncf %71 : vector<4x8x8xf32> to vector<4x8x8xbf16>
    %cst_25 = arith.constant dense<0.000000e+00> : vector<4x8x16xf32>
    %73 = tpu.matmul %72, %52, %cst_25 {dimension_numbers = #tpu.dot_dimension_numbers<[2], [1], [1], [2], [0, 0, 0, 1, 1, 2], [0], [0]>} : vector<4x8x8xbf16>, vector<4x8x16xbf16>, vector<4x8x16xf32> -> vector<4x8x16xf32>
    %74 = tpu.transpose %73, [1, 0, 2] : vector<4x8x16xf32> -> vector<8x4x16xf32>
    %75 = vector.shape_cast %74 : vector<8x4x16xf32> to vector<8x64xf32>
    %76 = arith.truncf %75 : vector<8x64xf32> to vector<8x64xbf16>
    %c0_26 = arith.constant 0 : index
    %c0_27 = arith.constant 0 : index
    %c0_28 = arith.constant 0 : index
    %77 = vector.load %arg7[%c0_26, %c0_27, %c0_28] : memref<1x64x64xbf16, #tpu.memory_space<vmem>>, vector<1x64x64xbf16>
    %78 = vector.shape_cast %77 : vector<1x64x64xbf16> to vector<64x64xbf16>
    %cst_29 = arith.constant dense<0.000000e+00> : vector<8x64xf32>
    %79 = tpu.matmul %76, %78, %cst_29 {dimension_numbers = #tpu.dot_dimension_numbers<[1], [0], [0], [1], [0, 0, 1, 1], [], []>} : vector<8x64xbf16>, vector<64x64xbf16>, vector<8x64xf32> -> vector<8x64xf32>
    %c0_30 = arith.constant 0 : index
    %c0_31 = arith.constant 0 : index
    %c0_32 = arith.constant 0 : index
    %80 = vector.load %arg8[%c0_30, %c0_31, %c0_32] : memref<1x1x64xf32, #tpu.memory_space<vmem>>, vector<1x1x64xf32>
    %81 = vector.shape_cast %80 : vector<1x1x64xf32> to vector<1x64xf32>
    %82 = vector.broadcast %81 : vector<1x64xf32> to vector<8x64xf32>
    %83 = arith.addf %79, %82 : vector<8x64xf32>
    %84 = arith.addf %4, %83 : vector<8x64xf32>
    %c0_33 = arith.constant 0 : index
    %c0_34 = arith.constant 0 : index
    %c0_35 = arith.constant 0 : index
    %85 = vector.load %arg9[%c0_33, %c0_34, %c0_35] : memref<1x1x64xf32, #tpu.memory_space<vmem>>, vector<1x1x64xf32>
    %86 = vector.shape_cast %85 : vector<1x1x64xf32> to vector<1x64xf32>
    %c0_36 = arith.constant 0 : index
    %c0_37 = arith.constant 0 : index
    %c0_38 = arith.constant 0 : index
    %87 = vector.load %arg10[%c0_36, %c0_37, %c0_38] : memref<1x1x64xf32, #tpu.memory_space<vmem>>, vector<1x1x64xf32>
    %88 = vector.shape_cast %87 : vector<1x1x64xf32> to vector<1x64xf32>
    %cst_39 = arith.constant dense<0.000000e+00> : vector<8xf32>
    %89 = vector.multi_reduction <add>, %84, %cst_39 [1] : vector<8x64xf32> to vector<8xf32>
    %90 = vector.shape_cast %89 : vector<8xf32> to vector<8x1xf32>
    %cst_40 = arith.constant 6.400000e+01 : f32
    %91 = vector.broadcast %cst_40 : f32 to vector<8x1xf32>
    %92 = arith.divf %90, %91 : vector<8x1xf32>
    %93 = vector.broadcast %92 : vector<8x1xf32> to vector<8x64xf32>
    %94 = arith.subf %84, %93 : vector<8x64xf32>
    %95 = arith.mulf %94, %94 : vector<8x64xf32>
    %cst_41 = arith.constant dense<0.000000e+00> : vector<8xf32>
    %96 = vector.multi_reduction <add>, %95, %cst_41 [1] : vector<8x64xf32> to vector<8xf32>
    %97 = vector.shape_cast %96 : vector<8xf32> to vector<8x1xf32>
    %cst_42 = arith.constant 6.400000e+01 : f32
    %98 = vector.broadcast %cst_42 : f32 to vector<8x1xf32>
    %99 = arith.divf %97, %98 : vector<8x1xf32>
    %100 = vector.broadcast %92 : vector<8x1xf32> to vector<8x64xf32>
    %101 = arith.subf %84, %100 : vector<8x64xf32>
    %cst_43 = arith.constant 9.99999974E-6 : f32
    %102 = vector.broadcast %cst_43 : f32 to vector<8x1xf32>
    %103 = arith.addf %99, %102 : vector<8x1xf32>
    %104 = math.rsqrt %103 : vector<8x1xf32>
    %105 = vector.broadcast %104 : vector<8x1xf32> to vector<8x64xf32>
    %106 = arith.mulf %101, %105 : vector<8x64xf32>
    %107 = vector.broadcast %86 : vector<1x64xf32> to vector<8x64xf32>
    %108 = arith.mulf %106, %107 : vector<8x64xf32>
    %109 = vector.broadcast %88 : vector<1x64xf32> to vector<8x64xf32>
    %110 = arith.addf %108, %109 : vector<8x64xf32>
    %111 = arith.truncf %110 : vector<8x64xf32> to vector<8x64xbf16>
    %c0_44 = arith.constant 0 : index
    %c0_45 = arith.constant 0 : index
    %c0_46 = arith.constant 0 : index
    %112 = vector.load %arg11[%c0_44, %c0_45, %c0_46] : memref<1x64x256xbf16, #tpu.memory_space<vmem>>, vector<1x64x256xbf16>
    %113 = vector.shape_cast %112 : vector<1x64x256xbf16> to vector<64x256xbf16>
    %cst_47 = arith.constant dense<0.000000e+00> : vector<8x256xf32>
    %114 = tpu.matmul %111, %113, %cst_47 {dimension_numbers = #tpu.dot_dimension_numbers<[1], [0], [0], [1], [0, 0, 1, 1], [], []>} : vector<8x64xbf16>, vector<64x256xbf16>, vector<8x256xf32> -> vector<8x256xf32>
    %c0_48 = arith.constant 0 : index
    %c0_49 = arith.constant 0 : index
    %c0_50 = arith.constant 0 : index
    %115 = vector.load %arg12[%c0_48, %c0_49, %c0_50] : memref<1x1x256xf32, #tpu.memory_space<vmem>>, vector<1x1x256xf32>
    %116 = vector.shape_cast %115 : vector<1x1x256xf32> to vector<1x256xf32>
    %117 = vector.broadcast %116 : vector<1x256xf32> to vector<8x256xf32>
    %118 = arith.addf %114, %117 : vector<8x256xf32>
    %cst_51 = arith.constant 1.702000e+00 : f32
    %119 = vector.broadcast %cst_51 : f32 to vector<8x256xf32>
    %120 = arith.mulf %119, %118 : vector<8x256xf32>
    %121 = arith.negf %120 : vector<8x256xf32>
    %122 = math.exp %121 : vector<8x256xf32>
    %cst_52 = arith.constant 1.000000e+00 : f32
    %123 = vector.broadcast %cst_52 : f32 to vector<8x256xf32>
    %124 = arith.addf %123, %122 : vector<8x256xf32>
    %125 = arith.divf %123, %124 : vector<8x256xf32>
    %126 = arith.mulf %118, %125 : vector<8x256xf32>
    %127 = arith.truncf %126 : vector<8x256xf32> to vector<8x256xbf16>
    %c0_53 = arith.constant 0 : index
    %c0_54 = arith.constant 0 : index
    %c0_55 = arith.constant 0 : index
    %128 = vector.load %arg13[%c0_53, %c0_54, %c0_55] : memref<1x256x64xbf16, #tpu.memory_space<vmem>>, vector<1x256x64xbf16>
    %129 = vector.shape_cast %128 : vector<1x256x64xbf16> to vector<256x64xbf16>
    %cst_56 = arith.constant dense<0.000000e+00> : vector<8x64xf32>
    %130 = tpu.matmul %127, %129, %cst_56 {dimension_numbers = #tpu.dot_dimension_numbers<[1], [0], [0], [1], [0, 0, 1, 1], [], []>} : vector<8x256xbf16>, vector<256x64xbf16>, vector<8x64xf32> -> vector<8x64xf32>
    %c0_57 = arith.constant 0 : index
    %c0_58 = arith.constant 0 : index
    %c0_59 = arith.constant 0 : index
    %131 = vector.load %arg14[%c0_57, %c0_58, %c0_59] : memref<1x1x64xf32, #tpu.memory_space<vmem>>, vector<1x1x64xf32>
    %132 = vector.shape_cast %131 : vector<1x1x64xf32> to vector<1x64xf32>
    %133 = vector.broadcast %132 : vector<1x64xf32> to vector<8x64xf32>
    %134 = arith.addf %130, %133 : vector<8x64xf32>
    %135 = arith.addf %84, %134 : vector<8x64xf32>
    %c1_i32 = arith.constant 1 : i32
    %136 = arith.cmpi slt, %arg1, %c1_i32 : i32
    %137 = arith.extui %136 : i1 to i32
    %c0_i32_60 = arith.constant 0 : i32
    %138 = arith.cmpi ne, %137, %c0_i32_60 : i32
    scf.if %138 {
      %c0_63 = arith.constant 0 : index
      %c0_64 = arith.constant 0 : index
      %c0_65 = arith.constant 0 : index
      %142 = vector.load %arg17[%c0_63, %c0_64, %c0_65] : memref<1x8x64xf32, #tpu.memory_space<vmem>>, vector<1x8x64xf32>
      %143 = vector.shape_cast %142 : vector<1x8x64xf32> to vector<8x64xf32>
      %144 = vector.shape_cast %135 : vector<8x64xf32> to vector<1x8x64xf32>
      tpu.vector_store %arg17[%c0_63, %c0_64, %c0_65], %144 {strides = array<i32>} : memref<1x8x64xf32, #tpu.memory_space<vmem>>, vector<1x8x64xf32>,
    } else {
    }
    %c1_i32_61 = arith.constant 1 : i32
    %139 = arith.cmpi eq, %arg1, %c1_i32_61 : i32
    %140 = arith.extui %139 : i1 to i32
    %c0_i32_62 = arith.constant 0 : i32
    %141 = arith.cmpi ne, %140, %c0_i32_62 : i32
    scf.if %141 {
      %c0_63 = arith.constant 0 : index
      %c0_64 = arith.constant 0 : index
      %142 = vector.load %arg15[%c0_63, %c0_64] : memref<1x64xf32, #tpu.memory_space<vmem>>, vector<1x64xf32>
      %c0_65 = arith.constant 0 : index
      %c0_66 = arith.constant 0 : index
      %143 = vector.load %arg16[%c0_65, %c0_66] : memref<1x64xf32, #tpu.memory_space<vmem>>, vector<1x64xf32>
      %cst_67 = arith.constant dense<0.000000e+00> : vector<8xf32>
      %144 = vector.multi_reduction <add>, %135, %cst_67 [1] : vector<8x64xf32> to vector<8xf32>
      %145 = vector.shape_cast %144 : vector<8xf32> to vector<8x1xf32>
      %cst_68 = arith.constant 6.400000e+01 : f32
      %146 = vector.broadcast %cst_68 : f32 to vector<8x1xf32>
      %147 = arith.divf %145, %146 : vector<8x1xf32>
      %148 = vector.broadcast %147 : vector<8x1xf32> to vector<8x64xf32>
      %149 = arith.subf %135, %148 : vector<8x64xf32>
      %150 = arith.mulf %149, %149 : vector<8x64xf32>
      %cst_69 = arith.constant dense<0.000000e+00> : vector<8xf32>
      %151 = vector.multi_reduction <add>, %150, %cst_69 [1] : vector<8x64xf32> to vector<8xf32>
      %152 = vector.shape_cast %151 : vector<8xf32> to vector<8x1xf32>
      %cst_70 = arith.constant 6.400000e+01 : f32
      %153 = vector.broadcast %cst_70 : f32 to vector<8x1xf32>
      %154 = arith.divf %152, %153 : vector<8x1xf32>
      %155 = vector.broadcast %147 : vector<8x1xf32> to vector<8x64xf32>
      %156 = arith.subf %135, %155 : vector<8x64xf32>
      %cst_71 = arith.constant 9.99999974E-6 : f32
      %157 = vector.broadcast %cst_71 : f32 to vector<8x1xf32>
      %158 = arith.addf %154, %157 : vector<8x1xf32>
      %159 = math.rsqrt %158 : vector<8x1xf32>
      %160 = vector.broadcast %159 : vector<8x1xf32> to vector<8x64xf32>
      %161 = arith.mulf %156, %160 : vector<8x64xf32>
      %162 = vector.broadcast %142 : vector<1x64xf32> to vector<8x64xf32>
      %163 = arith.mulf %161, %162 : vector<8x64xf32>
      %164 = vector.broadcast %143 : vector<1x64xf32> to vector<8x64xf32>
      %165 = arith.addf %163, %164 : vector<8x64xf32>
      %c0_72 = arith.constant 0 : index
      %c0_73 = arith.constant 0 : index
      %c0_74 = arith.constant 0 : index
      %166 = vector.load %arg17[%c0_72, %c0_73, %c0_74] : memref<1x8x64xf32, #tpu.memory_space<vmem>>, vector<1x8x64xf32>
      %167 = vector.shape_cast %166 : vector<1x8x64xf32> to vector<8x64xf32>
      %168 = vector.shape_cast %165 : vector<8x64xf32> to vector<1x8x64xf32>
      tpu.vector_store %arg17[%c0_72, %c0_73, %c0_74], %168 {strides = array<i32>} : memref<1x8x64xf32, #tpu.memory_space<vmem>>, vector<1x8x64xf32>,
    } else {
    }
    return
  }
  func.func @transform_0(%arg0: i32, %arg1: i32) -> (i32, i32, i32) {
    %c0_i32 = arith.constant 0 : i32
    %c0_i32_0 = arith.constant 0 : i32
    %c0_i32_1 = arith.constant 0 : i32
    return %arg0, %c0_i32, %c0_i32_0 : i32, i32, i32
  }
  func.func @transform_1(%arg0: i32, %arg1: i32) -> (i32, i32, i32) {
    %c0_i32 = arith.constant 0 : i32
    %c0_i32_0 = arith.constant 0 : i32
    %c0_i32_1 = arith.constant 0 : i32
    return %arg1, %c0_i32, %c0_i32_0 : i32, i32, i32
  }
  func.func @transform_2(%arg0: i32, %arg1: i32) -> (i32, i32, i32) {
    %c0_i32 = arith.constant 0 : i32
    %c0_i32_0 = arith.constant 0 : i32
    %c0_i32_1 = arith.constant 0 : i32
    return %arg1, %c0_i32, %c0_i32_0 : i32, i32, i32
  }
  func.func @transform_3(%arg0: i32, %arg1: i32) -> (i32, i32, i32) {
    %c0_i32 = arith.constant 0 : i32
    %c0_i32_0 = arith.constant 0 : i32
    %c0_i32_1 = arith.constant 0 : i32
    return %arg1, %c0_i32, %c0_i32_0 : i32, i32, i32
  }
  func.func @transform_4(%arg0: i32, %arg1: i32) -> (i32, i32, i32) {
    %c0_i32 = arith.constant 0 : i32
    %c0_i32_0 = arith.constant 0 : i32
    %c0_i32_1 = arith.constant 0 : i32
    return %arg1, %c0_i32, %c0_i32_0 : i32, i32, i32
  }
  func.func @transform_5(%arg0: i32, %arg1: i32) -> (i32, i32, i32) {
    %c0_i32 = arith.constant 0 : i32
    %c0_i32_0 = arith.constant 0 : i32
    %c0_i32_1 = arith.constant 0 : i32
    return %arg1, %c0_i32, %c0_i32_0 : i32, i32, i32
  }
  func.func @transform_6(%arg0: i32, %arg1: i32) -> (i32, i32, i32) {
    %c0_i32 = arith.constant 0 : i32
    %c0_i32_0 = arith.constant 0 : i32
    %c0_i32_1 = arith.constant 0 : i32
    return %arg1, %c0_i32, %c0_i32_0 : i32, i32, i32
  }
  func.func @transform_7(%arg0: i32, %arg1: i32) -> (i32, i32, i32) {
    %c0_i32 = arith.constant 0 : i32
    %c0_i32_0 = arith.constant 0 : i32
    %c0_i32_1 = arith.constant 0 : i32
    return %arg1, %c0_i32, %c0_i32_0 : i32, i32, i32
  }
  func.func @transform_8(%arg0: i32, %arg1: i32) -> (i32, i32, i32) {
    %c0_i32 = arith.constant 0 : i32
    %c0_i32_0 = arith.constant 0 : i32
    %c0_i32_1 = arith.constant 0 : i32
    return %arg1, %c0_i32, %c0_i32_0 : i32, i32, i32
  }
  func.func @transform_9(%arg0: i32, %arg1: i32) -> (i32, i32, i32) {
    %c0_i32 = arith.constant 0 : i32
    %c0_i32_0 = arith.constant 0 : i32
    %c0_i32_1 = arith.constant 0 : i32
    return %arg1, %c0_i32, %c0_i32_0 : i32, i32, i32
  }
  func.func @transform_10(%arg0: i32, %arg1: i32) -> (i32, i32, i32) {
    %c0_i32 = arith.constant 0 : i32
    %c0_i32_0 = arith.constant 0 : i32
    %c0_i32_1 = arith.constant 0 : i32
    return %arg1, %c0_i32, %c0_i32_0 : i32, i32, i32
  }
  func.func @transform_11(%arg0: i32, %arg1: i32) -> (i32, i32, i32) {
    %c0_i32 = arith.constant 0 : i32
    %c0_i32_0 = arith.constant 0 : i32
    %c0_i32_1 = arith.constant 0 : i32
    return %arg1, %c0_i32, %c0_i32_0 : i32, i32, i32
  }
  func.func @transform_12(%arg0: i32, %arg1: i32) -> (i32, i32, i32) {
    %c0_i32 = arith.constant 0 : i32
    %c0_i32_0 = arith.constant 0 : i32
    %c0_i32_1 = arith.constant 0 : i32
    return %arg1, %c0_i32, %c0_i32_0 : i32, i32, i32
  }
  func.func @transform_13(%arg0: i32, %arg1: i32) -> (i32, i32) {
    %c0_i32 = arith.constant 0 : i32
    %c0_i32_0 = arith.constant 0 : i32
    %c0_i32_1 = arith.constant 0 : i32
    return %c0_i32, %c0_i32_0 : i32, i32
  }
  func.func @transform_14(%arg0: i32, %arg1: i32) -> (i32, i32) {
    %c0_i32 = arith.constant 0 : i32
    %c0_i32_0 = arith.constant 0 : i32
    %c0_i32_1 = arith.constant 0 : i32
    return %c0_i32, %c0_i32_0 : i32, i32
  }
  func.func @transform_15(%arg0: i32, %arg1: i32) -> (i32, i32, i32) {
    %c0_i32 = arith.constant 0 : i32
    %c0_i32_0 = arith.constant 0 : i32
    %c0_i32_1 = arith.constant 0 : i32
    return %arg0, %c0_i32, %c0_i32_0 : i32, i32, i32
  }
}

</mosaic_0001>

<llo_original>
// kernel: tpu_custom_call.1
$region0: #{tpu_custom_call.1}
  #allocation0 [shape = 'u32[]', space=smem, size = 0x4, offset = 0x4, fixed_abs, tag = 'smem constant byte address 0x4 - core index']
  #allocation1 [shape = 'u32[144,128]{1,0:T(1,128)}', space=vmem, size = 0x12000, scoped, tag = 'internal scratch']
  %s0 = inlined_call_operand.vmem [shape: f32[2,8,64], index: 0, kind: input, shape index: {}]
  %s1 = inlined_call_operand.vmem [shape: f32[2,1,64], index: 1, kind: input, shape index: {}]
  %s2 = inlined_call_operand.vmem [shape: f32[2,1,64], index: 2, kind: input, shape index: {}]
  %s3 = inlined_call_operand.vmem [shape: bf16[2,64,192], index: 3, kind: input, shape index: {}]
  %s4 = inlined_call_operand.vmem [shape: f32[2,1,192], index: 4, kind: input, shape index: {}]
  %s5 = inlined_call_operand.vmem [shape: bf16[2,64,64], index: 5, kind: input, shape index: {}]
  %s6 = inlined_call_operand.vmem [shape: f32[2,1,64], index: 6, kind: input, shape index: {}]
  %s7 = inlined_call_operand.vmem [shape: f32[2,1,64], index: 7, kind: input, shape index: {}]
  %s8 = inlined_call_operand.vmem [shape: f32[2,1,64], index: 8, kind: input, shape index: {}]
  %s9 = inlined_call_operand.vmem [shape: bf16[2,64,256], index: 9, kind: input, shape index: {}]
  %s10 = inlined_call_operand.vmem [shape: f32[2,1,256], index: 10, kind: input, shape index: {}]
  %s11 = inlined_call_operand.vmem [shape: bf16[2,256,64], index: 11, kind: input, shape index: {}]
  %s12 = inlined_call_operand.vmem [shape: f32[2,1,64], index: 12, kind: input, shape index: {}]
  %s13 = inlined_call_operand.vmem [shape: f32[1,64], index: 13, kind: input, shape index: {}]
  %s14 = inlined_call_operand.vmem [shape: f32[1,64], index: 14, kind: input, shape index: {}]
  %s15 = inlined_call_operand.hbm [shape: f32[2,8,64], index: 15, kind: output, shape index: {}]
  %s16 = sld [smem:[#allocation0]]
  $region105: #{tpu_custom_call.1} parent=0
    _
  %s18 = ssub.s32 1, %s16
  %s19 = scalar_select 0, %s18, %s16
  $region1: #{tpu_custom_call.1} parent=0
    #allocation2 [shape = 'u8[8192]{0}', space=vmem, size = 0x2000, scoped, tag = 'output window, operand 0']
    #allocation3 [shape = 's32[2]{0}', space=sflag, size = 0x8, scoped, tag = 'scoped memory for tpu_custom_call.1']
    %20 = vsyncpa [#allocation3], 0
    %s21 = scalar_lea.sflag [#allocation3], 1
    %22 = vsyncpa %s21, 0
    loop: start=0, step=1, limit=6
    $region2: #{tpu_custom_call.1} parent=1 // loop_pre_header
      _
    $region3: #{tpu_custom_call.1} parent=1 // loop_header
      %s24 = sphi 0, %s28
      %p25 = scmp.ge.s32.totalorder %s24, 6
      %s31 = sphi 0, %s43
      %s32 = sphi 0, %s39
      %s33 = sphi 0, %s31
      %s34 = sphi 0, %s32
      %s35 = sphi 0, %s33
      %s36 = sphi 0, %s34
      %s46 = sphi 0, %s48
      %s49 = sphi 0, %s46
      %s50 = sphi 0, %s49
      %s66 = sphi 0, %s50
      %s72 = sphi 0, %s74
      %s75 = sphi 0, %s72
      %s76 = sphi 0, %s75
      %s92 = sphi 0, %s76
      %s98 = sphi 0, %s100
      %s101 = sphi 0, %s98
      %s102 = sphi 0, %s101
      %s118 = sphi 0, %s102
      %s124 = sphi 0, %s126
      %s127 = sphi 0, %s124
      %s128 = sphi 0, %s127
      %s144 = sphi 0, %s128
      %s150 = sphi 0, %s152
      %s153 = sphi 0, %s150
      %s154 = sphi 0, %s153
      %s170 = sphi 0, %s154
      %s176 = sphi 0, %s178
      %s179 = sphi 0, %s176
      %s180 = sphi 0, %s179
      %s196 = sphi 0, %s180
      %s202 = sphi 0, %s204
      %s205 = sphi 0, %s202
      %s206 = sphi 0, %s205
      %s222 = sphi 0, %s206
      %s228 = sphi 0, %s230
      %s231 = sphi 0, %s228
      %s232 = sphi 0, %s231
      %s248 = sphi 0, %s232
      %s254 = sphi 0, %s256
      %s257 = sphi 0, %s254
      %s258 = sphi 0, %s257
      %s274 = sphi 0, %s258
      %s280 = sphi 0, %s282
      %s283 = sphi 0, %s280
      %s284 = sphi 0, %s283
      %s300 = sphi 0, %s284
      %s306 = sphi 0, %s308
      %s309 = sphi 0, %s306
      %s310 = sphi 0, %s309
      %s326 = sphi 0, %s310
      %s332 = sphi 0, %s334
      %s335 = sphi 0, %s332
      %s336 = sphi 0, %s335
      %s352 = sphi 0, %s336
      %s358 = sphi 0, %s360
      %s361 = sphi 0, %s358
      %s362 = sphi 0, %s361
      %s378 = sphi 0, %s362
      %s382 = sphi 0, %s382
      %s384 = sphi 0, %s382
      %s385 = sphi 0, %s384
      %s399 = sphi 0, %s385
      %s403 = sphi 0, %s403
      %s405 = sphi 0, %s403
      %s406 = sphi 0, %s405
      %s420 = sphi 0, %s406
      %s426 = sphi 0, %s428
      %s429 = sphi 0, %s426
      %s430 = sphi 0, %s429
      %s446 = sphi 0, %s430
    $region4: #{tpu_custom_call.1} parent=1 // loop_header_branch
      %27 = sbr.rel (%p25) target = $region8
    $region5: #{tpu_custom_call.1} parent=1 // loop_body
      %s29 = ssub.s32 %s24, 1
      %s30 = ssub.s32 %s24, 2
      %s37 = sadd.s32 1, %s32
      %p38 = scmp.ge.s32.totalorder %s37, 2
      %s39 = scalar_select %p38, 0, %s37
      %s40 = sadd.s32 1, %s31
      %s41 = scalar_select %p38, %s40, %s31
      %p42 = scmp.ge.s32.totalorder %s41, 2
      %s43 = scalar_select %p42, 0, %s41
      %s44 = ssub.s32 %s31, %s43
      %p45 = scmp.eq.s32.totalorder %s44, 0
      %s47 = sadd.s32 %s46, 1
      %s48 = scalar_select %p45, %s46, %s47
      %p51 = pneg %p45
      %p52 = scmp.eq.s32.totalorder %s24, 3
      %p53 = por %p51, %p52
      %p54 = scmp.ne.s32.totalorder %s46, %s49
      %p55 = scmp.eq.s32.totalorder %s24, 0
      %p56 = por %p54, %p55
      %p57 = scmp.ne.s32.totalorder %s46, %s49
      %p58 = scmp.eq.s32.totalorder %s29, 3
      %p59 = por %p57, %p58
      %p60 = scmp.ne.s32.totalorder %s49, %s50
      %p61 = scmp.eq.s32.totalorder %s29, 0
      %p62 = por %p60, %p61
      %p63 = scmp.ne.s32.totalorder %s49, %s50
      %p64 = scmp.eq.s32.totalorder %s30, 3
      %p65 = por %p63, %p64
      %p67 = scmp.ne.s32.totalorder %s50, %s66
      %p68 = scmp.eq.s32.totalorder %s30, 0
      %p69 = por %p67, %p68
      %s70 = ssub.s32 %s32, %s39
      %p71 = scmp.eq.s32.totalorder %s70, 0
      %s73 = sadd.s32 %s72, 1
      %s74 = scalar_select %p71, %s72, %s73
      %p77 = pneg %p71
      %p78 = scmp.eq.s32.totalorder %s24, 3
      %p79 = por %p77, %p78
      %p80 = scmp.ne.s32.totalorder %s72, %s75
      %p81 = scmp.eq.s32.totalorder %s24, 0
      %p82 = por %p80, %p81
      %p83 = scmp.ne.s32.totalorder %s72, %s75
      %p84 = scmp.eq.s32.totalorder %s29, 3
      %p85 = por %p83, %p84
      %p86 = scmp.ne.s32.totalorder %s75, %s76
      %p87 = scmp.eq.s32.totalorder %s29, 0
      %p88 = por %p86, %p87
      %p89 = scmp.ne.s32.totalorder %s75, %s76
      %p90 = scmp.eq.s32.totalorder %s30, 3
      %p91 = por %p89, %p90
      %p93 = scmp.ne.s32.totalorder %s76, %s92
      %p94 = scmp.eq.s32.totalorder %s30, 0
      %p95 = por %p93, %p94
      %s96 = ssub.s32 %s32, %s39
      %p97 = scmp.eq.s32.totalorder %s96, 0
      %s99 = sadd.s32 %s98, 1
      %s100 = scalar_select %p97, %s98, %s99
      %p103 = pneg %p97
      %p104 = scmp.eq.s32.totalorder %s24, 3
      %p105 = por %p103, %p104
      %p106 = scmp.ne.s32.totalorder %s98, %s101
      %p107 = scmp.eq.s32.totalorder %s24, 0
      %p108 = por %p106, %p107
      %p109 = scmp.ne.s32.totalorder %s98, %s101
      %p110 = scmp.eq.s32.totalorder %s29, 3
      %p111 = por %p109, %p110
      %p112 = scmp.ne.s32.totalorder %s101, %s102
      %p113 = scmp.eq.s32.totalorder %s29, 0
      %p114 = por %p112, %p113
      %p115 = scmp.ne.s32.totalorder %s101, %s102
      %p116 = scmp.eq.s32.totalorder %s30, 3
      %p117 = por %p115, %p116
      %p119 = scmp.ne.s32.totalorder %s102, %s118
      %p120 = scmp.eq.s32.totalorder %s30, 0
      %p121 = por %p119, %p120
      %s122 = ssub.s32 %s32, %s39
      %p123 = scmp.eq.s32.totalorder %s122, 0
      %s125 = sadd.s32 %s124, 1
      %s126 = scalar_select %p123, %s124, %s125
      %p129 = pneg %p123
      %p130 = scmp.eq.s32.totalorder %s24, 3
      %p131 = por %p129, %p130
      %p132 = scmp.ne.s32.totalorder %s124, %s127
      %p133 = scmp.eq.s32.totalorder %s24, 0
      %p134 = por %p132, %p133
      %p135 = scmp.ne.s32.totalorder %s124, %s127
      %p136 = scmp.eq.s32.totalorder %s29, 3
      %p137 = por %p135, %p136
      %p138 = scmp.ne.s32.totalorder %s127, %s128
      %p139 = scmp.eq.s32.totalorder %s29, 0
      %p140 = por %p138, %p139
      %p141 = scmp.ne.s32.totalorder %s127, %s128
      %p142 = scmp.eq.s32.totalorder %s30, 3
      %p143 = por %p141, %p142
      %p145 = scmp.ne.s32.totalorder %s128, %s144
      %p146 = scmp.eq.s32.totalorder %s30, 0
      %p147 = por %p145, %p146
      %s148 = ssub.s32 %s32, %s39
      %p149 = scmp.eq.s32.totalorder %s148, 0
      %s151 = sadd.s32 %s150, 1
      %s152 = scalar_select %p149, %s150, %s151
      %p155 = pneg %p149
      %p156 = scmp.eq.s32.totalorder %s24, 3
      %p157 = por %p155, %p156
      %p158 = scmp.ne.s32.totalorder %s150, %s153
      %p159 = scmp.eq.s32.totalorder %s24, 0
      %p160 = por %p158, %p159
      %p161 = scmp.ne.s32.totalorder %s150, %s153
      %p162 = scmp.eq.s32.totalorder %s29, 3
      %p163 = por %p161, %p162
      %p164 = scmp.ne.s32.totalorder %s153, %s154
      %p165 = scmp.eq.s32.totalorder %s29, 0
      %p166 = por %p164, %p165
      %p167 = scmp.ne.s32.totalorder %s153, %s154
      %p168 = scmp.eq.s32.totalorder %s30, 3
      %p169 = por %p167, %p168
      %p171 = scmp.ne.s32.totalorder %s154, %s170
      %p172 = scmp.eq.s32.totalorder %s30, 0
      %p173 = por %p171, %p172
      %s174 = ssub.s32 %s32, %s39
      %p175 = scmp.eq.s32.totalorder %s174, 0
      %s177 = sadd.s32 %s176, 1
      %s178 = scalar_select %p175, %s176, %s177
      %p181 = pneg %p175
      %p182 = scmp.eq.s32.totalorder %s24, 3
      %p183 = por %p181, %p182
      %p184 = scmp.ne.s32.totalorder %s176, %s179
      %p185 = scmp.eq.s32.totalorder %s24, 0
      %p186 = por %p184, %p185
      %p187 = scmp.ne.s32.totalorder %s176, %s179
      %p188 = scmp.eq.s32.totalorder %s29, 3
      %p189 = por %p187, %p188
      %p190 = scmp.ne.s32.totalorder %s179, %s180
      %p191 = scmp.eq.s32.totalorder %s29, 0
      %p192 = por %p190, %p191
      %p193 = scmp.ne.s32.totalorder %s179, %s180
      %p194 = scmp.eq.s32.totalorder %s30, 3
      %p195 = por %p193, %p194
      %p197 = scmp.ne.s32.totalorder %s180, %s196
      %p198 = scmp.eq.s32.totalorder %s30, 0
      %p199 = por %p197, %p198
      %s200 = ssub.s32 %s32, %s39
      %p201 = scmp.eq.s32.totalorder %s200, 0
      %s203 = sadd.s32 %s202, 1
      %s204 = scalar_select %p201, %s202, %s203
      %p207 = pneg %p201
      %p208 = scmp.eq.s32.totalorder %s24, 3
      %p209 = por %p207, %p208
      %p210 = scmp.ne.s32.totalorder %s202, %s205
      %p211 = scmp.eq.s32.totalorder %s24, 0
      %p212 = por %p210, %p211
      %p213 = scmp.ne.s32.totalorder %s202, %s205
      %p214 = scmp.eq.s32.totalorder %s29, 3
      %p215 = por %p213, %p214
      %p216 = scmp.ne.s32.totalorder %s205, %s206
      %p217 = scmp.eq.s32.totalorder %s29, 0
      %p218 = por %p216, %p217
      %p219 = scmp.ne.s32.totalorder %s205, %s206
      %p220 = scmp.eq.s32.totalorder %s30, 3
      %p221 = por %p219, %p220
      %p223 = scmp.ne.s32.totalorder %s206, %s222
      %p224 = scmp.eq.s32.totalorder %s30, 0
      %p225 = por %p223, %p224
      %s226 = ssub.s32 %s32, %s39
      %p227 = scmp.eq.s32.totalorder %s226, 0
      %s229 = sadd.s32 %s228, 1
      %s230 = scalar_select %p227, %s228, %s229
      %p233 = pneg %p227
      %p234 = scmp.eq.s32.totalorder %s24, 3
      %p235 = por %p233, %p234
      %p236 = scmp.ne.s32.totalorder %s228, %s231
      %p237 = scmp.eq.s32.totalorder %s24, 0
      %p238 = por %p236, %p237
      %p239 = scmp.ne.s32.totalorder %s228, %s231
      %p240 = scmp.eq.s32.totalorder %s29, 3
      %p241 = por %p239, %p240
      %p242 = scmp.ne.s32.totalorder %s231, %s232
      %p243 = scmp.eq.s32.totalorder %s29, 0
      %p244 = por %p242, %p243
      %p245 = scmp.ne.s32.totalorder %s231, %s232
      %p246 = scmp.eq.s32.totalorder %s30, 3
      %p247 = por %p245, %p246
      %p249 = scmp.ne.s32.totalorder %s232, %s248
      %p250 = scmp.eq.s32.totalorder %s30, 0
      %p251 = por %p249, %p250
      %s252 = ssub.s32 %s32, %s39
      %p253 = scmp.eq.s32.totalorder %s252, 0
      %s255 = sadd.s32 %s254, 1
      %s256 = scalar_select %p253, %s254, %s255
      %p259 = pneg %p253
      %p260 = scmp.eq.s32.totalorder %s24, 3
      %p261 = por %p259, %p260
      %p262 = scmp.ne.s32.totalorder %s254, %s257
      %p263 = scmp.eq.s32.totalorder %s24, 0
      %p264 = por %p262, %p263
      %p265 = scmp.ne.s32.totalorder %s254, %s257
      %p266 = scmp.eq.s32.totalorder %s29, 3
      %p267 = por %p265, %p266
      %p268 = scmp.ne.s32.totalorder %s257, %s258
      %p269 = scmp.eq.s32.totalorder %s29, 0
      %p270 = por %p268, %p269
      %p271 = scmp.ne.s32.totalorder %s257, %s258
      %p272 = scmp.eq.s32.totalorder %s30, 3
      %p273 = por %p271, %p272
      %p275 = scmp.ne.s32.totalorder %s258, %s274
      %p276 = scmp.eq.s32.totalorder %s30, 0
      %p277 = por %p275, %p276
      %s278 = ssub.s32 %s32, %s39
      %p279 = scmp.eq.s32.totalorder %s278, 0
      %s281 = sadd.s32 %s280, 1
      %s282 = scalar_select %p279, %s280, %s281
      %p285 = pneg %p279
      %p286 = scmp.eq.s32.totalorder %s24, 3
      %p287 = por %p285, %p286
      %p288 = scmp.ne.s32.totalorder %s280, %s283
      %p289 = scmp.eq.s32.totalorder %s24, 0
      %p290 = por %p288, %p289
      %p291 = scmp.ne.s32.totalorder %s280, %s283
      %p292 = scmp.eq.s32.totalorder %s29, 3
      %p293 = por %p291, %p292
      %p294 = scmp.ne.s32.totalorder %s283, %s284
      %p295 = scmp.eq.s32.totalorder %s29, 0
      %p296 = por %p294, %p295
      %p297 = scmp.ne.s32.totalorder %s283, %s284
      %p298 = scmp.eq.s32.totalorder %s30, 3
      %p299 = por %p297, %p298
      %p301 = scmp.ne.s32.totalorder %s284, %s300
      %p302 = scmp.eq.s32.totalorder %s30, 0
      %p303 = por %p301, %p302
      %s304 = ssub.s32 %s32, %s39
      %p305 = scmp.eq.s32.totalorder %s304, 0
      %s307 = sadd.s32 %s306, 1
      %s308 = scalar_select %p305, %s306, %s307
      %p311 = pneg %p305
      %p312 = scmp.eq.s32.totalorder %s24, 3
      %p313 = por %p311, %p312
      %p314 = scmp.ne.s32.totalorder %s306, %s309
      %p315 = scmp.eq.s32.totalorder %s24, 0
      %p316 = por %p314, %p315
      %p317 = scmp.ne.s32.totalorder %s306, %s309
      %p318 = scmp.eq.s32.totalorder %s29, 3
      %p319 = por %p317, %p318
      %p320 = scmp.ne.s32.totalorder %s309, %s310
      %p321 = scmp.eq.s32.totalorder %s29, 0
      %p322 = por %p320, %p321
      %p323 = scmp.ne.s32.totalorder %s309, %s310
      %p324 = scmp.eq.s32.totalorder %s30, 3
      %p325 = por %p323, %p324
      %p327 = scmp.ne.s32.totalorder %s310, %s326
      %p328 = scmp.eq.s32.totalorder %s30, 0
      %p329 = por %p327, %p328
      %s330 = ssub.s32 %s32, %s39
      %p331 = scmp.eq.s32.totalorder %s330, 0
      %s333 = sadd.s32 %s332, 1
      %s334 = scalar_select %p331, %s332, %s333
      %p337 = pneg %p331
      %p338 = scmp.eq.s32.totalorder %s24, 3
      %p339 = por %p337, %p338
      %p340 = scmp.ne.s32.totalorder %s332, %s335
      %p341 = scmp.eq.s32.totalorder %s24, 0
      %p342 = por %p340, %p341
      %p343 = scmp.ne.s32.totalorder %s332, %s335
      %p344 = scmp.eq.s32.totalorder %s29, 3
      %p345 = por %p343, %p344
      %p346 = scmp.ne.s32.totalorder %s335, %s336
      %p347 = scmp.eq.s32.totalorder %s29, 0
      %p348 = por %p346, %p347
      %p349 = scmp.ne.s32.totalorder %s335, %s336
      %p350 = scmp.eq.s32.totalorder %s30, 3
      %p351 = por %p349, %p350
      %p353 = scmp.ne.s32.totalorder %s336, %s352
      %p354 = scmp.eq.s32.totalorder %s30, 0
      %p355 = por %p353, %p354
      %s356 = ssub.s32 %s32, %s39
      %p357 = scmp.eq.s32.totalorder %s356, 0
      %s359 = sadd.s32 %s358, 1
      %s360 = scalar_select %p357, %s358, %s359
      %p363 = pneg %p357
      %p364 = scmp.eq.s32.totalorder %s24, 3
      %p365 = por %p363, %p364
      %p366 = scmp.ne.s32.totalorder %s358, %s361
      %p367 = scmp.eq.s32.totalorder %s24, 0
      %p368 = por %p366, %p367
      %p369 = scmp.ne.s32.totalorder %s358, %s361
      %p370 = scmp.eq.s32.totalorder %s29, 3
      %p371 = por %p369, %p370
      %p372 = scmp.ne.s32.totalorder %s361, %s362
      %p373 = scmp.eq.s32.totalorder %s29, 0
      %p374 = por %p372, %p373
      %p375 = scmp.ne.s32.totalorder %s361, %s362
      %p376 = scmp.eq.s32.totalorder %s30, 3
      %p377 = por %p375, %p376
      %p379 = scmp.ne.s32.totalorder %s362, %s378
      %p380 = scmp.eq.s32.totalorder %s30, 0
      %p381 = por %p379, %p380
      %s383 = sadd.s32 %s382, 1
      %p386 = scmp.eq.s32.totalorder %s24, 3
      %p387 = scmp.ne.s32.totalorder %s382, %s384
      %p388 = scmp.eq.s32.totalorder %s24, 0
      %p389 = por %p387, %p388
      %p390 = scmp.ne.s32.totalorder %s382, %s384
      %p391 = scmp.eq.s32.totalorder %s29, 3
      %p392 = por %p390, %p391
      %p393 = scmp.ne.s32.totalorder %s384, %s385
      %p394 = scmp.eq.s32.totalorder %s29, 0
      %p395 = por %p393, %p394
      %p396 = scmp.ne.s32.totalorder %s384, %s385
      %p397 = scmp.eq.s32.totalorder %s30, 3
      %p398 = por %p396, %p397
      %p400 = scmp.ne.s32.totalorder %s385, %s399
      %p401 = scmp.eq.s32.totalorder %s30, 0
      %p402 = por %p400, %p401
      %s404 = sadd.s32 %s403, 1
      %p407 = scmp.eq.s32.totalorder %s24, 3
      %p408 = scmp.ne.s32.totalorder %s403, %s405
      %p409 = scmp.eq.s32.totalorder %s24, 0
      %p410 = por %p408, %p409
      %p411 = scmp.ne.s32.totalorder %s403, %s405
      %p412 = scmp.eq.s32.totalorder %s29, 3
      %p413 = por %p411, %p412
      %p414 = scmp.ne.s32.totalorder %s405, %s406
      %p415 = scmp.eq.s32.totalorder %s29, 0
      %p416 = por %p414, %p415
      %p417 = scmp.ne.s32.totalorder %s405, %s406
      %p418 = scmp.eq.s32.totalorder %s30, 3
      %p419 = por %p417, %p418
      %p421 = scmp.ne.s32.totalorder %s406, %s420
      %p422 = scmp.eq.s32.totalorder %s30, 0
      %p423 = por %p421, %p422
      %s424 = ssub.s32 %s31, %s43
      %p425 = scmp.eq.s32.totalorder %s424, 0
      %s427 = sadd.s32 %s426, 1
      %s428 = scalar_select %p425, %s426, %s427
      %p431 = pneg %p425
      %p432 = scmp.eq.s32.totalorder %s24, 3
      %p433 = por %p431, %p432
      %p434 = scmp.ne.s32.totalorder %s426, %s429
      %p435 = scmp.eq.s32.totalorder %s24, 0
      %p436 = por %p434, %p435
      %p437 = scmp.ne.s32.totalorder %s426, %s429
      %p438 = scmp.eq.s32.totalorder %s29, 3
      %p439 = por %p437, %p438
      %p440 = scmp.ne.s32.totalorder %s429, %s430
      %p441 = scmp.eq.s32.totalorder %s29, 0
      %p442 = por %p440, %p441
      %p443 = scmp.ne.s32.totalorder %s429, %s430
      %p444 = scmp.eq.s32.totalorder %s30, 3
      %p445 = por %p443, %p444
      %p447 = scmp.ne.s32.totalorder %s430, %s446
      %p448 = scmp.eq.s32.totalorder %s30, 0
      %p449 = por %p447, %p448
      %p450 = scmp.le.s32.totalorder 1, %s24
      %p451 = scmp.lt.s32.totalorder %s24, 5
      %p452 = pnand %p450, %p451
      %p453 = pneg %p452
      // Predicated region
      $region9: #{tpu_custom_call.1} parent=5 // pred_check
        _
      $region10: #{tpu_custom_call.1} parent=5 // pred_check_branch
        %455 = sbr.rel (%p452) target = $region12
      $region11: #{tpu_custom_call.1} parent=5 // pred_region
        %s456 = ssub.s32 %s24, 1
        // Predicated region
        $region13: #{tpu_custom_call.1} parent=11 // pred_check
          %p457 = pneg %p395
        $region14: #{tpu_custom_call.1} parent=11 // pred_check_branch
          %459 = sbr.rel (%p457) target = $region16
        $region15: #{tpu_custom_call.1} parent=11 // pred_region
          _
        $region16: #{tpu_custom_call.1} parent=11 // pred_fallthru
          _
        // Predicated region
        $region17: #{tpu_custom_call.1} parent=11 // pred_check
          %p460 = pneg %p416
        $region18: #{tpu_custom_call.1} parent=11 // pred_check_branch
          %462 = sbr.rel (%p460) target = $region20
        $region19: #{tpu_custom_call.1} parent=11 // pred_region
          _
        $region20: #{tpu_custom_call.1} parent=11 // pred_fallthru
          _
      $region12: #{tpu_custom_call.1} parent=5 // pred_fallthru
        _
      %p463 = scmp.lt.s32.totalorder %s24, 4
      // Predicated region
      $region21: #{tpu_custom_call.1} parent=5 // pred_check
        %p464 = pneg %p463
      $region22: #{tpu_custom_call.1} parent=5 // pred_check_branch
        %466 = sbr.rel (%p464) target = $region24
      $region23: #{tpu_custom_call.1} parent=5 // pred_region
        // Predicated region
        $region25: #{tpu_custom_call.1} parent=23 // pred_check
          %p467 = pneg %p56
        $region26: #{tpu_custom_call.1} parent=23 // pred_check_branch
          %469 = sbr.rel (%p467) target = $region28
        $region27: #{tpu_custom_call.1} parent=23 // pred_region
          %p470 = scmp.lt.s32.totalorder %s31, 1
          %s471 = scalar_select %p470, %s31, 1
          %s472 = smul.addr %s471, 8
          %s473 = scalar_lea.vmem %s0, %s472
        $region28: #{tpu_custom_call.1} parent=23 // pred_fallthru
          _
        // Predicated region
        $region29: #{tpu_custom_call.1} parent=23 // pred_check
          %p474 = pneg %p82
        $region30: #{tpu_custom_call.1} parent=23 // pred_check_branch
          %476 = sbr.rel (%p474) target = $region32
        $region31: #{tpu_custom_call.1} parent=23 // pred_region
          %p477 = scmp.lt.s32.totalorder %s32, 1
          %s478 = scalar_select %p477, %s32, 1
          %s479 = scalar_lea.vmem %s1, %s478
        $region32: #{tpu_custom_call.1} parent=23 // pred_fallthru
          _
        // Predicated region
        $region33: #{tpu_custom_call.1} parent=23 // pred_check
          %p480 = pneg %p108
        $region34: #{tpu_custom_call.1} parent=23 // pred_check_branch
          %482 = sbr.rel (%p480) target = $region36
        $region35: #{tpu_custom_call.1} parent=23 // pred_region
          %p483 = scmp.lt.s32.totalorder %s32, 1
          %s484 = scalar_select %p483, %s32, 1
          %s485 = scalar_lea.vmem %s2, %s484
        $region36: #{tpu_custom_call.1} parent=23 // pred_fallthru
          _
        // Predicated region
        $region37: #{tpu_custom_call.1} parent=23 // pred_check
          %p486 = pneg %p134
        $region38: #{tpu_custom_call.1} parent=23 // pred_check_branch
          %488 = sbr.rel (%p486) target = $region40
        $region39: #{tpu_custom_call.1} parent=23 // pred_region
          %p489 = scmp.lt.s32.totalorder %s32, 1
          %s490 = scalar_select %p489, %s32, 1
          %s491 = smul.addr %s490, 16
          %s492 = smul.addr %s491, 4
          %s493 = scalar_lea.vmem %s3, %s492
        $region40: #{tpu_custom_call.1} parent=23 // pred_fallthru
          _
        // Predicated region
        $region41: #{tpu_custom_call.1} parent=23 // pred_check
          %p494 = pneg %p160
        $region42: #{tpu_custom_call.1} parent=23 // pred_check_branch
          %496 = sbr.rel (%p494) target = $region44
        $region43: #{tpu_custom_call.1} parent=23 // pred_region
          %p497 = scmp.lt.s32.totalorder %s32, 1
          %s498 = scalar_select %p497, %s32, 1
          %s499 = smul.addr %s498, 2
          %s500 = scalar_lea.vmem %s4, %s499
        $region44: #{tpu_custom_call.1} parent=23 // pred_fallthru
          _
        // Predicated region
        $region45: #{tpu_custom_call.1} parent=23 // pred_check
          %p501 = pneg %p186
        $region46: #{tpu_custom_call.1} parent=23 // pred_check_branch
          %503 = sbr.rel (%p501) target = $region48
        $region47: #{tpu_custom_call.1} parent=23 // pred_region
          %p504 = scmp.lt.s32.totalorder %s32, 1
          %s505 = scalar_select %p504, %s32, 1
          %s506 = smul.addr %s505, 8
          %s507 = smul.addr %s506, 4
          %s508 = scalar_lea.vmem %s5, %s507
        $region48: #{tpu_custom_call.1} parent=23 // pred_fallthru
          _
        // Predicated region
        $region49: #{tpu_custom_call.1} parent=23 // pred_check
          %p509 = pneg %p212
        $region50: #{tpu_custom_call.1} parent=23 // pred_check_branch
          %511 = sbr.rel (%p509) target = $region52
        $region51: #{tpu_custom_call.1} parent=23 // pred_region
          %p512 = scmp.lt.s32.totalorder %s32, 1
          %s513 = scalar_select %p512, %s32, 1
          %s514 = scalar_lea.vmem %s6, %s513
        $region52: #{tpu_custom_call.1} parent=23 // pred_fallthru
          _
        // Predicated region
        $region53: #{tpu_custom_call.1} parent=23 // pred_check
          %p515 = pneg %p238
        $region54: #{tpu_custom_call.1} parent=23 // pred_check_branch
          %517 = sbr.rel (%p515) target = $region56
        $region55: #{tpu_custom_call.1} parent=23 // pred_region
          %p518 = scmp.lt.s32.totalorder %s32, 1
          %s519 = scalar_select %p518, %s32, 1
          %s520 = scalar_lea.vmem %s7, %s519
        $region56: #{tpu_custom_call.1} parent=23 // pred_fallthru
          _
        // Predicated region
        $region57: #{tpu_custom_call.1} parent=23 // pred_check
          %p521 = pneg %p264
        $region58: #{tpu_custom_call.1} parent=23 // pred_check_branch
          %523 = sbr.rel (%p521) target = $region60
        $region59: #{tpu_custom_call.1} parent=23 // pred_region
          %p524 = scmp.lt.s32.totalorder %s32, 1
          %s525 = scalar_select %p524, %s32, 1
          %s526 = scalar_lea.vmem %s8, %s525
        $region60: #{tpu_custom_call.1} parent=23 // pred_fallthru
          _
        // Predicated region
        $region61: #{tpu_custom_call.1} parent=23 // pred_check
          %p527 = pneg %p290
        $region62: #{tpu_custom_call.1} parent=23 // pred_check_branch
          %529 = sbr.rel (%p527) target = $region64
        $region63: #{tpu_custom_call.1} parent=23 // pred_region
          %p530 = scmp.lt.s32.totalorder %s32, 1
          %s531 = scalar_select %p530, %s32, 1
          %s532 = smul.addr %s531, 16
          %s533 = smul.addr %s532, 4
          %s534 = scalar_lea.vmem %s9, %s533
        $region64: #{tpu_custom_call.1} parent=23 // pred_fallthru
          _
        // Predicated region
        $region65: #{tpu_custom_call.1} parent=23 // pred_check
          %p535 = pneg %p316
        $region66: #{tpu_custom_call.1} parent=23 // pred_check_branch
          %537 = sbr.rel (%p535) target = $region68
        $region67: #{tpu_custom_call.1} parent=23 // pred_region
          %p538 = scmp.lt.s32.totalorder %s32, 1
          %s539 = scalar_select %p538, %s32, 1
          %s540 = smul.addr %s539, 2
          %s541 = scalar_lea.vmem %s10, %s540
        $region68: #{tpu_custom_call.1} parent=23 // pred_fallthru
          _
        // Predicated region
        $region69: #{tpu_custom_call.1} parent=23 // pred_check
          %p542 = pneg %p342
        $region70: #{tpu_custom_call.1} parent=23 // pred_check_branch
          %544 = sbr.rel (%p542) target = $region72
        $region71: #{tpu_custom_call.1} parent=23 // pred_region
          %p545 = scmp.lt.s32.totalorder %s32, 1
          %s546 = scalar_select %p545, %s32, 1
          %s547 = smul.addr %s546, 32
          %s548 = smul.addr %s547, 4
          %s549 = scalar_lea.vmem %s11, %s548
        $region72: #{tpu_custom_call.1} parent=23 // pred_fallthru
          _
        // Predicated region
        $region73: #{tpu_custom_call.1} parent=23 // pred_check
          %p550 = pneg %p368
        $region74: #{tpu_custom_call.1} parent=23 // pred_check_branch
          %552 = sbr.rel (%p550) target = $region76
        $region75: #{tpu_custom_call.1} parent=23 // pred_region
          %p553 = scmp.lt.s32.totalorder %s32, 1
          %s554 = scalar_select %p553, %s32, 1
          %s555 = scalar_lea.vmem %s12, %s554
        $region76: #{tpu_custom_call.1} parent=23 // pred_fallthru
          _
      $region24: #{tpu_custom_call.1} parent=5 // pred_fallthru
        _
      %p556 = scmp.le.s32.totalorder 1, %s24
      %p557 = scmp.lt.s32.totalorder %s24, 5
      %p558 = pnand %p556, %p557
      %p559 = pneg %p558
      // Predicated region
      $region77: #{tpu_custom_call.1} parent=5 // pred_check
        _
      $region78: #{tpu_custom_call.1} parent=5 // pred_check_branch
        %561 = sbr.rel (%p558) target = $region80
      $region79: #{tpu_custom_call.1} parent=5 // pred_region
        %s562 = ssub.s32 %s24, 1
        %p563 = scmp.lt.s32.totalorder %s33, 1
        %s564 = scalar_select %p563, %s33, 1
        %s565 = smul.addr %s564, 8
        %s566 = scalar_lea.vmem %s0, %s565
        %p567 = pneg %p62
        %p568 = pneg %p59
        %p569 = scmp.lt.s32.totalorder %s34, 1
        %s570 = scalar_select %p569, %s34, 1
        %s571 = scalar_lea.vmem %s1, %s570
        %p572 = pneg %p88
        %p573 = pneg %p85
        %p574 = scmp.lt.s32.totalorder %s34, 1
        %s575 = scalar_select %p574, %s34, 1
        %s576 = scalar_lea.vmem %s2, %s575
        %p577 = pneg %p114
        %p578 = pneg %p111
        %p579 = scmp.lt.s32.totalorder %s34, 1
        %s580 = scalar_select %p579, %s34, 1
        %s581 = smul.addr %s580, 16
        %s582 = smul.addr %s581, 4
        %s583 = scalar_lea.vmem %s3, %s582
        %p584 = pneg %p140
        %p585 = pneg %p137
        %p586 = scmp.lt.s32.totalorder %s34, 1
        %s587 = scalar_select %p586, %s34, 1
        %s588 = smul.addr %s587, 2
        %s589 = scalar_lea.vmem %s4, %s588
        %p590 = pneg %p166
        %p591 = pneg %p163
        %p592 = scmp.lt.s32.totalorder %s34, 1
        %s593 = scalar_select %p592, %s34, 1
        %s594 = smul.addr %s593, 8
        %s595 = smul.addr %s594, 4
        %s596 = scalar_lea.vmem %s5, %s595
        %p597 = pneg %p192
        %p598 = pneg %p189
        %p599 = scmp.lt.s32.totalorder %s34, 1
        %s600 = scalar_select %p599, %s34, 1
        %s601 = scalar_lea.vmem %s6, %s600
        %p602 = pneg %p218
        %p603 = pneg %p215
        %p604 = scmp.lt.s32.totalorder %s34, 1
        %s605 = scalar_select %p604, %s34, 1
        %s606 = scalar_lea.vmem %s7, %s605
        %p607 = pneg %p244
        %p608 = pneg %p241
        %p609 = scmp.lt.s32.totalorder %s34, 1
        %s610 = scalar_select %p609, %s34, 1
        %s611 = scalar_lea.vmem %s8, %s610
        %p612 = pneg %p270
        %p613 = pneg %p267
        %p614 = scmp.lt.s32.totalorder %s34, 1
        %s615 = scalar_select %p614, %s34, 1
        %s616 = smul.addr %s615, 16
        %s617 = smul.addr %s616, 4
        %s618 = scalar_lea.vmem %s9, %s617
        %p619 = pneg %p296
        %p620 = pneg %p293
        %p621 = scmp.lt.s32.totalorder %s34, 1
        %s622 = scalar_select %p621, %s34, 1
        %s623 = smul.addr %s622, 2
        %s624 = scalar_lea.vmem %s10, %s623
        %p625 = pneg %p322
        %p626 = pneg %p319
        %p627 = scmp.lt.s32.totalorder %s34, 1
        %s628 = scalar_select %p627, %s34, 1
        %s629 = smul.addr %s628, 32
        %s630 = smul.addr %s629, 4
        %s631 = scalar_lea.vmem %s11, %s630
        %p632 = pneg %p348
        %p633 = pneg %p345
        %p634 = scmp.lt.s32.totalorder %s34, 1
        %s635 = scalar_select %p634, %s34, 1
        %s636 = scalar_lea.vmem %s12, %s635
        %p637 = pneg %p374
        %p638 = pneg %p371
        %p639 = pneg %p395
        %p640 = pneg %p392
        %p641 = pneg %p416
        %p642 = pneg %p413
        %p643 = pneg %p442
        %p644 = pneg %p439
        %s645 = sand.u32 %s429, 1
        %s646 = scalar_lea.sflag [#allocation3], %s645
        %s647 = sand.u32 %s429, 1
        %s648 = smul.addr %s647, 8
        %s649 = scalar_lea.vmem [#allocation2], %s648
        %p650 = scmp.lt.s32.totalorder %s33, 1
        %s651 = scalar_select %p650, %s33, 1
        %s652 = smul.addr %s651, 8
        %s653 = scalar_lea.vmem %s0, %s652
        %p654 = scmp.lt.s32.totalorder %s34, 1
        %s655 = scalar_select %p654, %s34, 1
        %s656 = scalar_lea.vmem %s1, %s655
        %p657 = scmp.lt.s32.totalorder %s34, 1
        %s658 = scalar_select %p657, %s34, 1
        %s659 = scalar_lea.vmem %s2, %s658
        %p660 = scmp.lt.s32.totalorder %s34, 1
        %s661 = scalar_select %p660, %s34, 1
        %s662 = smul.addr %s661, 16
        %s663 = smul.addr %s662, 4
        %s664 = scalar_lea.vmem %s3, %s663
        %p665 = scmp.lt.s32.totalorder %s34, 1
        %s666 = scalar_select %p665, %s34, 1
        %s667 = smul.addr %s666, 2
        %s668 = scalar_lea.vmem %s4, %s667
        %p669 = scmp.lt.s32.totalorder %s34, 1
        %s670 = scalar_select %p669, %s34, 1
        %s671 = smul.addr %s670, 8
        %s672 = smul.addr %s671, 4
        %s673 = scalar_lea.vmem %s5, %s672
        %p674 = scmp.lt.s32.totalorder %s34, 1
        %s675 = scalar_select %p674, %s34, 1
        %s676 = scalar_lea.vmem %s6, %s675
        %p677 = scmp.lt.s32.totalorder %s34, 1
        %s678 = scalar_select %p677, %s34, 1
        %s679 = scalar_lea.vmem %s7, %s678
        %p680 = scmp.lt.s32.totalorder %s34, 1
        %s681 = scalar_select %p680, %s34, 1
        %s682 = scalar_lea.vmem %s8, %s681
        %p683 = scmp.lt.s32.totalorder %s34, 1
        %s684 = scalar_select %p683, %s34, 1
        %s685 = smul.addr %s684, 16
        %s686 = smul.addr %s685, 4
        %s687 = scalar_lea.vmem %s9, %s686
        %p688 = scmp.lt.s32.totalorder %s34, 1
        %s689 = scalar_select %p688, %s34, 1
        %s690 = smul.addr %s689, 2
        %s691 = scalar_lea.vmem %s10, %s690
        %p692 = scmp.lt.s32.totalorder %s34, 1
        %s693 = scalar_select %p692, %s34, 1
        %s694 = smul.addr %s693, 32
        %s695 = smul.addr %s694, 4
        %s696 = scalar_lea.vmem %s11, %s695
        %p697 = scmp.lt.s32.totalorder %s34, 1
        %s698 = scalar_select %p697, %s34, 1
        %s699 = scalar_lea.vmem %s12, %s698
        %p701 = scmp.eq.s32.totalorder %s34, 0
        // Predicated region
        $region81: #{tpu_custom_call.1} parent=79 // pred_check
          %p702 = pneg %p701
        $region82: #{tpu_custom_call.1} parent=79 // pred_check_branch
          %704 = sbr.rel (%p702) target = $region84
        $region83: #{tpu_custom_call.1} parent=79 // pred_region
          %v705 = vld [vmem:[%s653] sm:$0xff]
          %vm706 = vcmask 523264
          %707 = vst.msk [vmem:[%s649] sm:$0xff] %vm706, %v705
        $region84: #{tpu_custom_call.1} parent=79 // pred_fallthru
          _
        %v708 = vld [vmem:[%s649] sm:$0xff]
        %v709 = vld [vmem:[%s656] sm:$0x1]
        %v710 = vld [vmem:[%s659] sm:$0x1]
        %vm711 = vcmask 523264
        %v712 = vsel %vm711, %v708, 0.0
        %713 = vadd.xlane.f32.xlu0 %v712
        %v714 = vpop.xlane.xlu0 %713
        %v715 = vrcp.pop 64.0
        %v716 = vmul.f32 %v714, %v715
        %v717 = vsub.f32 %v708, %v716
        %v718 = vmul.f32 %v717, %v717
        %v719 = vsel %vm711, %v718, 0.0
        %720 = vadd.xlane.f32.xlu0 %v719
        %v721 = vpop.xlane.xlu0 %720
        %v722 = vmul.f32 %v721, %v715
        %v723 = vadd.f32 %v722, 1e-05
        %v724 = vrsqrt.pop %v723
        %v725 = vmul.f32 %v717, %v724
        %v727 = vlaneseq
        %v728 = vshrl.u32 %v727, 7
        %v729 = vsub.s32 0, %v728
        %v730 = vrot.slane %v709, %v729
        %v732 = vmul.f32 %v725, %v730
        %v734 = vlaneseq
        %v735 = vshrl.u32 %v734, 7
        %v736 = vsub.s32 0, %v735
        %v737 = vrot.slane %v710, %v736
        %v739 = vadd.f32 %v732, %v737
        %v740 = vpack.c.bf16 %v739, %v739
        %v741 = vld [vmem:[%s664] sm:$0xff]
        %v742 = vld [vmem:[%s664 + $0x8] sm:$0xff]
        %v743 = vld [vmem:[%s664 + $0x10] sm:$0xff]
        %v744 = vld [vmem:[%s664 + $0x18] sm:$0xff]
        %v745 = vld [vmem:[%s664 + $0x20] sm:$0xff]
        %v746 = vld [vmem:[%s664 + $0x28] sm:$0xff]
        %v747 = vld [vmem:[%s664 + $0x30] sm:$0xff]
        %v748 = vld [vmem:[%s664 + $0x38] sm:$0xff]
        %v749 = vld [vmem:[%s668] sm:$0x3]
        %v751 = vlaneseq
        %v752 = vshrl.u32 %v751, 7
        %v753 = vsub.s32 0, %v752
        %v754 = vrot.slane %v749, %v753
        %v755 = vlaneseq
        %v756 = vshrl.u32 %v755, 7
        %v757 = vsub.s32 1, %v756
        %v758 = vrot.slane %v749, %v757
        %v769 = vunpack.c.l.b16 %v741
        %v770 = vunpack.c.h.b16 %v741
        %v771 = vunpack.c.l.b16 %v742
        %v772 = vunpack.c.h.b16 %v742
        %v773 = vunpack.c.l.b16 %v743
        %v774 = vunpack.c.h.b16 %v743
        %v775 = vunpack.c.l.b16 %v744
        %v776 = vunpack.c.h.b16 %v744
        %v777 = vunpack.c.l.b16 %v745
        %v778 = vunpack.c.h.b16 %v745
        %v779 = vunpack.c.l.b16 %v746
        %v780 = vunpack.c.h.b16 %v746
        %v781 = vunpack.c.l.b16 %v747
        %v782 = vunpack.c.h.b16 %v747
        %v783 = vunpack.c.l.b16 %v748
        %v784 = vunpack.c.h.b16 %v748
        %v785 = vpack.c.b16 %v771, %v769
        %v786 = vpack.c.b16 %v772, %v770
        %v787 = vpack.c.b16 %v775, %v773
        %v788 = vpack.c.b16 %v776, %v774
        %v789 = vpack.c.b16 %v779, %v777
        %v790 = vpack.c.b16 %v780, %v778
        %v791 = vpack.c.b16 %v783, %v781
        %v792 = vpack.c.b16 %v784, %v782
        %v802 = vsel %vm711, %v740, 0
        %804 = vmatprep.subr.bf16.mxu0 %v786
        %805 = vmatpush1.bf16.msra.mxu0 %v785
        %806 = vmatprep.subr.bf16.mxu0 %v788
        %807 = vmatpush1.bf16.msra.mxu0 %v787
        %808 = vmatprep.subr.bf16.mxu0 %v790
        %809 = vmatpush1.bf16.msra.mxu0 %v789
        %810 = vmatprep.subr.bf16.mxu0 %v792
        %811 = vmatpush1.bf16.msra.mxu0 %v791
        %812 = vmatprep.subr.bf16.mxu0 0
        %813 = vmatpush1.bf16.msra.mxu0 0
        %814 = vmatprep.subr.bf16.mxu0 0
        %815 = vmatpush1.bf16.msra.mxu0 0
        %816 = vmatprep.subr.bf16.mxu0 0
        %817 = vmatpush1.bf16.msra.mxu0 0
        %818 = vmatprep.subr.bf16.mxu0 0
        %819 = vmatpush1.bf16.msra.mxu0 0
        %820 = vmatprep.subr.bf16.mxu0 0
        %821 = vmatpush1.bf16.msra.mxu0 0
        %822 = vmatprep.subr.bf16.mxu0 0
        %823 = vmatpush1.bf16.msra.mxu0 0
        %824 = vmatprep.subr.bf16.mxu0 0
        %825 = vmatpush1.bf16.msra.mxu0 0
        %826 = vmatprep.subr.bf16.mxu0 0
        %827 = vmatpush1.bf16.msra.mxu0 0
        %828 = vmatprep.subr.bf16.mxu0 0
        %829 = vmatpush1.bf16.msra.mxu0 0
        %830 = vmatprep.subr.bf16.mxu0 0
        %831 = vmatpush1.bf16.msra.mxu0 0
        %832 = vmatprep.subr.bf16.mxu0 0
        %833 = vmatpush1.bf16.msra.mxu0 0
        %834 = vmatprep.subr.bf16.mxu0 0
        %835 = vmatpush1.bf16.msra.mxu0 0
        %836 = vmatprep.mubr.bf16.mxu0 0
        %837 = vmatmul.mubr.bf16.gmra.mrb[0].mxu0 %v802
        %v838 = vpop.f32.mrb[0].mxu0
        %v839 = vadd.f32 %v754, %v838
        %v840 = vpop.f32.mrb[0].mxu0
        %v841 = vadd.f32 %v758, %v840
        %v842 = vpop.f32.mrb[0].mxu0
        %v843 = vpop.f32.mrb[0].mxu0
        %844 = vdwg.mxu0
        %v845 = vmul.f32 %v839, 0.25
        %847 = vrot.lane.b32.xlu0 %v845, 112
        %v848 = vpop.permute.xlu0 %847
        %850 = vrot.lane.b32.xlu0 %v845, 96
        %v851 = vpop.permute.xlu0 %850
        %853 = vrot.lane.b32.xlu0 %v845, 80
        %v854 = vpop.permute.xlu0 %853
        %v856 = vcombine.low %v845, %v851
        %v857 = vcombine.high %v845, %v851
        %v859 = vunpack.c.l.s4 1983009808
        %v860 = vunpack.c.0.s8 %v859
        %v861 = vlaneseq
        %v862 = vshrl.u32 %v861, 7
        %v863 = vsub.s32 %v860, %v862
        %v864 = vrot.slane %v856, %v863
        %v866 = vunpack.c.l.s4 1983009808
        %v867 = vunpack.c.0.s8 %v866
        %v868 = vlaneseq
        %v869 = vshrl.u32 %v868, 7
        %v870 = vsub.s32 %v867, %v869
        %v871 = vrot.slane %v857, %v870
        %v872 = vcombine.low %v848, %v854
        %v873 = vcombine.high %v848, %v854
        %v875 = vunpack.c.l.s4 1983009808
        %v876 = vunpack.c.0.s8 %v875
        %v877 = vlaneseq
        %v878 = vshrl.u32 %v877, 7
        %v879 = vsub.s32 %v876, %v878
        %v880 = vrot.slane %v872, %v879
        %v882 = vunpack.c.l.s4 1983009808
        %v883 = vunpack.c.0.s8 %v882
        %v884 = vlaneseq
        %v885 = vshrl.u32 %v884, 7
        %v886 = vsub.s32 %v883, %v885
        %v887 = vrot.slane %v873, %v886
        %v888 = vcombine.low %v864, %v880
        %v889 = vcombine.high %v864, %v880
        %v891 = vunpack.c.l.s4 1934713408
        %v892 = vunpack.c.0.s8 %v891
        %v893 = vlaneseq
        %v894 = vshrl.u32 %v893, 7
        %v895 = vsub.s32 %v892, %v894
        %v896 = vrot.slane %v888, %v895
        %v898 = vunpack.c.l.s4 1934713408
        %v899 = vunpack.c.0.s8 %v898
        %v900 = vlaneseq
        %v901 = vshrl.u32 %v900, 7
        %v902 = vsub.s32 %v899, %v901
        %v903 = vrot.slane %v889, %v902
        %v904 = vcombine.low %v871, %v887
        %v905 = vcombine.high %v871, %v887
        %v907 = vunpack.c.l.s4 1934713408
        %v908 = vunpack.c.0.s8 %v907
        %v909 = vlaneseq
        %v910 = vshrl.u32 %v909, 7
        %v911 = vsub.s32 %v908, %v910
        %v912 = vrot.slane %v904, %v911
        %v914 = vunpack.c.l.s4 1934713408
        %v915 = vunpack.c.0.s8 %v914
        %v916 = vlaneseq
        %v917 = vshrl.u32 %v916, 7
        %v918 = vsub.s32 %v915, %v917
        %v919 = vrot.slane %v905, %v918
        %v920 = vcombine.high %v896, 0.0
        %v921 = vcombine.high %v903, 0.0
        %v922 = vcombine.high %v912, 0.0
        %v923 = vcombine.high %v919, 0.0
        %v924 = vcombine.low %v896, %v903
        %v926 = vunpack.c.l.s4 1983009808
        %v927 = vunpack.c.0.s8 %v926
        %v928 = vlaneseq
        %v929 = vshrl.u32 %v928, 7
        %v930 = vsub.s32 %v927, %v929
        %v931 = vrot.slane %v924, %v930
        %v932 = vcombine.low %v920, %v921
        %v934 = vunpack.c.l.s4 1983009808
        %v935 = vunpack.c.0.s8 %v934
        %v936 = vlaneseq
        %v937 = vshrl.u32 %v936, 7
        %v938 = vsub.s32 %v935, %v937
        %v939 = vrot.slane %v932, %v938
        %v940 = vcombine.low %v912, %v919
        %v942 = vunpack.c.l.s4 1983009808
        %v943 = vunpack.c.0.s8 %v942
        %v944 = vlaneseq
        %v945 = vshrl.u32 %v944, 7
        %v946 = vsub.s32 %v943, %v945
        %v947 = vrot.slane %v940, %v946
        %v948 = vcombine.low %v922, %v923
        %v950 = vunpack.c.l.s4 1983009808
        %v951 = vunpack.c.0.s8 %v950
        %v952 = vlaneseq
        %v953 = vshrl.u32 %v952, 7
        %v954 = vsub.s32 %v951, %v953
        %v955 = vrot.slane %v948, %v954
        %v956 = vcombine.low %v931, %v939
        %v957 = vcombine.high %v931, %v939
        %v959 = vunpack.c.l.s4 1934713408
        %v960 = vunpack.c.0.s8 %v959
        %v961 = vlaneseq
        %v962 = vshrl.u32 %v961, 7
        %v963 = vsub.s32 %v960, %v962
        %v964 = vrot.slane %v956, %v963
        %v966 = vunpack.c.l.s4 1934713408
        %v967 = vunpack.c.0.s8 %v966
        %v968 = vlaneseq
        %v969 = vshrl.u32 %v968, 7
        %v970 = vsub.s32 %v967, %v969
        %v971 = vrot.slane %v957, %v970
        %v972 = vcombine.low %v947, %v955
        %v973 = vcombine.high %v947, %v955
        %v975 = vunpack.c.l.s4 1934713408
        %v976 = vunpack.c.0.s8 %v975
        %v977 = vlaneseq
        %v978 = vshrl.u32 %v977, 7
        %v979 = vsub.s32 %v976, %v978
        %v980 = vrot.slane %v972, %v979
        %v982 = vunpack.c.l.s4 1934713408
        %v983 = vunpack.c.0.s8 %v982
        %v984 = vlaneseq
        %v985 = vshrl.u32 %v984, 7
        %v986 = vsub.s32 %v983, %v985
        %v987 = vrot.slane %v973, %v986
        %v988 = vcombine.low %v964, %v980
        %v989 = vcombine.high %v964, %v980
        %v990 = vcombine.low %v971, %v987
        %v991 = vcombine.high %v971, %v987
        %v992 = vpack.c.bf16 %v988, %v988
        %v993 = vpack.c.bf16 %v989, %v989
        %v994 = vpack.c.bf16 %v990, %v990
        %v995 = vpack.c.bf16 %v991, %v991
        %997 = vrot.lane.b32.xlu0 %v839, 112
        %v998 = vpop.permute.xlu0 %997
        %999 = vrot.lane.b32.xlu0 %v839, 96
        %v1000 = vpop.permute.xlu0 %999
        %1001 = vrot.lane.b32.xlu0 %v839, 80
        %v1002 = vpop.permute.xlu0 %1001
        %1003 = vrot.lane.b32.xlu0 %v839, 64
        %v1004 = vpop.permute.xlu0 %1003
        %1005 = vrot.lane.b32.xlu0 %v998, 64
        %v1006 = vpop.permute.xlu0 %1005
        %1007 = vrot.lane.b32.xlu0 %v1000, 64
        %v1008 = vpop.permute.xlu0 %1007
        %1009 = vrot.lane.b32.xlu0 %v1002, 64
        %v1010 = vpop.permute.xlu0 %1009
        %v1015 = vcombine.low %v1004, %v1008
        %v1016 = vcombine.high %v1004, %v1008
        %v1018 = vunpack.c.l.s4 1983009808
        %v1019 = vunpack.c.0.s8 %v1018
        %v1020 = vlaneseq
        %v1021 = vshrl.u32 %v1020, 7
        %v1022 = vsub.s32 %v1019, %v1021
        %v1023 = vrot.slane %v1015, %v1022
        %v1025 = vunpack.c.l.s4 1983009808
        %v1026 = vunpack.c.0.s8 %v1025
        %v1027 = vlaneseq
        %v1028 = vshrl.u32 %v1027, 7
        %v1029 = vsub.s32 %v1026, %v1028
        %v1030 = vrot.slane %v1016, %v1029
        %v1031 = vcombine.low %v1006, %v1010
        %v1032 = vcombine.high %v1006, %v1010
        %v1034 = vunpack.c.l.s4 1983009808
        %v1035 = vunpack.c.0.s8 %v1034
        %v1036 = vlaneseq
        %v1037 = vshrl.u32 %v1036, 7
        %v1038 = vsub.s32 %v1035, %v1037
        %v1039 = vrot.slane %v1031, %v1038
        %v1041 = vunpack.c.l.s4 1983009808
        %v1042 = vunpack.c.0.s8 %v1041
        %v1043 = vlaneseq
        %v1044 = vshrl.u32 %v1043, 7
        %v1045 = vsub.s32 %v1042, %v1044
        %v1046 = vrot.slane %v1032, %v1045
        %v1047 = vcombine.low %v1023, %v1039
        %v1048 = vcombine.high %v1023, %v1039
        %v1050 = vunpack.c.l.s4 1934713408
        %v1051 = vunpack.c.0.s8 %v1050
        %v1052 = vlaneseq
        %v1053 = vshrl.u32 %v1052, 7
        %v1054 = vsub.s32 %v1051, %v1053
        %v1055 = vrot.slane %v1047, %v1054
        %v1057 = vunpack.c.l.s4 1934713408
        %v1058 = vunpack.c.0.s8 %v1057
        %v1059 = vlaneseq
        %v1060 = vshrl.u32 %v1059, 7
        %v1061 = vsub.s32 %v1058, %v1060
        %v1062 = vrot.slane %v1048, %v1061
        %v1063 = vcombine.low %v1030, %v1046
        %v1064 = vcombine.high %v1030, %v1046
        %v1066 = vunpack.c.l.s4 1934713408
        %v1067 = vunpack.c.0.s8 %v1066
        %v1068 = vlaneseq
        %v1069 = vshrl.u32 %v1068, 7
        %v1070 = vsub.s32 %v1067, %v1069
        %v1071 = vrot.slane %v1063, %v1070
        %v1073 = vunpack.c.l.s4 1934713408
        %v1074 = vunpack.c.0.s8 %v1073
        %v1075 = vlaneseq
        %v1076 = vshrl.u32 %v1075, 7
        %v1077 = vsub.s32 %v1074, %v1076
        %v1078 = vrot.slane %v1064, %v1077
        %v1079 = vcombine.high %v1055, 0.0
        %v1080 = vcombine.high %v1062, 0.0
        %v1081 = vcombine.high %v1071, 0.0
        %v1082 = vcombine.high %v1078, 0.0
        %v1083 = vcombine.low %v1055, %v1062
        %v1085 = vunpack.c.l.s4 1983009808
        %v1086 = vunpack.c.0.s8 %v1085
        %v1087 = vlaneseq
        %v1088 = vshrl.u32 %v1087, 7
        %v1089 = vsub.s32 %v1086, %v1088
        %v1090 = vrot.slane %v1083, %v1089
        %v1091 = vcombine.low %v1079, %v1080
        %v1093 = vunpack.c.l.s4 1983009808
        %v1094 = vunpack.c.0.s8 %v1093
        %v1095 = vlaneseq
        %v1096 = vshrl.u32 %v1095, 7
        %v1097 = vsub.s32 %v1094, %v1096
        %v1098 = vrot.slane %v1091, %v1097
        %v1099 = vcombine.low %v1071, %v1078
        %v1101 = vunpack.c.l.s4 1983009808
        %v1102 = vunpack.c.0.s8 %v1101
        %v1103 = vlaneseq
        %v1104 = vshrl.u32 %v1103, 7
        %v1105 = vsub.s32 %v1102, %v1104
        %v1106 = vrot.slane %v1099, %v1105
        %v1107 = vcombine.low %v1081, %v1082
        %v1109 = vunpack.c.l.s4 1983009808
        %v1110 = vunpack.c.0.s8 %v1109
        %v1111 = vlaneseq
        %v1112 = vshrl.u32 %v1111, 7
        %v1113 = vsub.s32 %v1110, %v1112
        %v1114 = vrot.slane %v1107, %v1113
        %v1115 = vcombine.low %v1090, %v1098
        %v1116 = vcombine.high %v1090, %v1098
        %v1118 = vunpack.c.l.s4 1934713408
        %v1119 = vunpack.c.0.s8 %v1118
        %v1120 = vlaneseq
        %v1121 = vshrl.u32 %v1120, 7
        %v1122 = vsub.s32 %v1119, %v1121
        %v1123 = vrot.slane %v1115, %v1122
        %v1125 = vunpack.c.l.s4 1934713408
        %v1126 = vunpack.c.0.s8 %v1125
        %v1127 = vlaneseq
        %v1128 = vshrl.u32 %v1127, 7
        %v1129 = vsub.s32 %v1126, %v1128
        %v1130 = vrot.slane %v1116, %v1129
        %v1131 = vcombine.low %v1106, %v1114
        %v1132 = vcombine.high %v1106, %v1114
        %v1134 = vunpack.c.l.s4 1934713408
        %v1135 = vunpack.c.0.s8 %v1134
        %v1136 = vlaneseq
        %v1137 = vshrl.u32 %v1136, 7
        %v1138 = vsub.s32 %v1135, %v1137
        %v1139 = vrot.slane %v1131, %v1138
        %v1141 = vunpack.c.l.s4 1934713408
        %v1142 = vunpack.c.0.s8 %v1141
        %v1143 = vlaneseq
        %v1144 = vshrl.u32 %v1143, 7
        %v1145 = vsub.s32 %v1142, %v1144
        %v1146 = vrot.slane %v1132, %v1145
        %v1147 = vcombine.low %v1123, %v1139
        %v1148 = vcombine.high %v1123, %v1139
        %v1149 = vcombine.low %v1130, %v1146
        %v1150 = vcombine.high %v1130, %v1146
        %v1151 = vpack.c.bf16 %v1147, %v1147
        %v1152 = vpack.c.bf16 %v1148, %v1148
        %v1153 = vpack.c.bf16 %v1149, %v1149
        %v1154 = vpack.c.bf16 %v1150, %v1150
        %1156 = vrot.lane.b32.xlu0 %v841, 112
        %v1157 = vpop.permute.xlu0 %1156
        %1159 = vrot.lane.b32.xlu0 %v841, 96
        %v1160 = vpop.permute.xlu0 %1159
        %1162 = vrot.lane.b32.xlu0 %v841, 80
        %v1163 = vpop.permute.xlu0 %1162
        %v1165 = vcombine.low %v841, %v1160
        %v1166 = vcombine.high %v841, %v1160
        %v1168 = vunpack.c.l.s4 1983009808
        %v1169 = vunpack.c.0.s8 %v1168
        %v1170 = vlaneseq
        %v1171 = vshrl.u32 %v1170, 7
        %v1172 = vsub.s32 %v1169, %v1171
        %v1173 = vrot.slane %v1165, %v1172
        %v1175 = vunpack.c.l.s4 1983009808
        %v1176 = vunpack.c.0.s8 %v1175
        %v1177 = vlaneseq
        %v1178 = vshrl.u32 %v1177, 7
        %v1179 = vsub.s32 %v1176, %v1178
        %v1180 = vrot.slane %v1166, %v1179
        %v1181 = vcombine.low %v1157, %v1163
        %v1182 = vcombine.high %v1157, %v1163
        %v1184 = vunpack.c.l.s4 1983009808
        %v1185 = vunpack.c.0.s8 %v1184
        %v1186 = vlaneseq
        %v1187 = vshrl.u32 %v1186, 7
        %v1188 = vsub.s32 %v1185, %v1187
        %v1189 = vrot.slane %v1181, %v1188
        %v1191 = vunpack.c.l.s4 1983009808
        %v1192 = vunpack.c.0.s8 %v1191
        %v1193 = vlaneseq
        %v1194 = vshrl.u32 %v1193, 7
        %v1195 = vsub.s32 %v1192, %v1194
        %v1196 = vrot.slane %v1182, %v1195
        %v1197 = vcombine.low %v1173, %v1189
        %v1198 = vcombine.high %v1173, %v1189
        %v1200 = vunpack.c.l.s4 1934713408
        %v1201 = vunpack.c.0.s8 %v1200
        %v1202 = vlaneseq
        %v1203 = vshrl.u32 %v1202, 7
        %v1204 = vsub.s32 %v1201, %v1203
        %v1205 = vrot.slane %v1197, %v1204
        %v1207 = vunpack.c.l.s4 1934713408
        %v1208 = vunpack.c.0.s8 %v1207
        %v1209 = vlaneseq
        %v1210 = vshrl.u32 %v1209, 7
        %v1211 = vsub.s32 %v1208, %v1210
        %v1212 = vrot.slane %v1198, %v1211
        %v1213 = vcombine.low %v1180, %v1196
        %v1214 = vcombine.high %v1180, %v1196
        %v1216 = vunpack.c.l.s4 1934713408
        %v1217 = vunpack.c.0.s8 %v1216
        %v1218 = vlaneseq
        %v1219 = vshrl.u32 %v1218, 7
        %v1220 = vsub.s32 %v1217, %v1219
        %v1221 = vrot.slane %v1213, %v1220
        %v1223 = vunpack.c.l.s4 1934713408
        %v1224 = vunpack.c.0.s8 %v1223
        %v1225 = vlaneseq
        %v1226 = vshrl.u32 %v1225, 7
        %v1227 = vsub.s32 %v1224, %v1226
        %v1228 = vrot.slane %v1214, %v1227
        %v1229 = vcombine.high %v1205, 0.0
        %v1230 = vcombine.high %v1212, 0.0
        %v1231 = vcombine.high %v1221, 0.0
        %v1232 = vcombine.high %v1228, 0.0
        %v1233 = vcombine.low %v1205, %v1212
        %v1235 = vunpack.c.l.s4 1983009808
        %v1236 = vunpack.c.0.s8 %v1235
        %v1237 = vlaneseq
        %v1238 = vshrl.u32 %v1237, 7
        %v1239 = vsub.s32 %v1236, %v1238
        %v1240 = vrot.slane %v1233, %v1239
        %v1241 = vcombine.low %v1229, %v1230
        %v1243 = vunpack.c.l.s4 1983009808
        %v1244 = vunpack.c.0.s8 %v1243
        %v1245 = vlaneseq
        %v1246 = vshrl.u32 %v1245, 7
        %v1247 = vsub.s32 %v1244, %v1246
        %v1248 = vrot.slane %v1241, %v1247
        %v1249 = vcombine.low %v1221, %v1228
        %v1251 = vunpack.c.l.s4 1983009808
        %v1252 = vunpack.c.0.s8 %v1251
        %v1253 = vlaneseq
        %v1254 = vshrl.u32 %v1253, 7
        %v1255 = vsub.s32 %v1252, %v1254
        %v1256 = vrot.slane %v1249, %v1255
        %v1257 = vcombine.low %v1231, %v1232
        %v1259 = vunpack.c.l.s4 1983009808
        %v1260 = vunpack.c.0.s8 %v1259
        %v1261 = vlaneseq
        %v1262 = vshrl.u32 %v1261, 7
        %v1263 = vsub.s32 %v1260, %v1262
        %v1264 = vrot.slane %v1257, %v1263
        %v1265 = vcombine.low %v1240, %v1248
        %v1266 = vcombine.high %v1240, %v1248
        %v1268 = vunpack.c.l.s4 1934713408
        %v1269 = vunpack.c.0.s8 %v1268
        %v1270 = vlaneseq
        %v1271 = vshrl.u32 %v1270, 7
        %v1272 = vsub.s32 %v1269, %v1271
        %v1273 = vrot.slane %v1265, %v1272
        %v1275 = vunpack.c.l.s4 1934713408
        %v1276 = vunpack.c.0.s8 %v1275
        %v1277 = vlaneseq
        %v1278 = vshrl.u32 %v1277, 7
        %v1279 = vsub.s32 %v1276, %v1278
        %v1280 = vrot.slane %v1266, %v1279
        %v1281 = vcombine.low %v1256, %v1264
        %v1282 = vcombine.high %v1256, %v1264
        %v1284 = vunpack.c.l.s4 1934713408
        %v1285 = vunpack.c.0.s8 %v1284
        %v1286 = vlaneseq
        %v1287 = vshrl.u32 %v1286, 7
        %v1288 = vsub.s32 %v1285, %v1287
        %v1289 = vrot.slane %v1281, %v1288
        %v1291 = vunpack.c.l.s4 1934713408
        %v1292 = vunpack.c.0.s8 %v1291
        %v1293 = vlaneseq
        %v1294 = vshrl.u32 %v1293, 7
        %v1295 = vsub.s32 %v1292, %v1294
        %v1296 = vrot.slane %v1282, %v1295
        %v1297 = vcombine.low %v1273, %v1289
        %v1298 = vcombine.high %v1273, %v1289
        %v1299 = vcombine.low %v1280, %v1296
        %v1300 = vcombine.high %v1280, %v1296
        %v1301 = vpack.c.bf16 %v1297, %v1297
        %v1302 = vpack.c.bf16 %v1298, %v1298
        %v1303 = vpack.c.bf16 %v1299, %v1299
        %v1304 = vpack.c.bf16 %v1300, %v1300
        %vm1305 = vcmask 130048
        %v1307 = vsel %vm1305, %v992, 0
        %v1310 = vsel %vm1305, %v1151, 0
        %1312 = vmatprep.subr.bf16.mxu0 0
        %1313 = vmatpush1.bf16.xpose.msra.mxu0 %v1310
        %1314 = vmatprep.subr.bf16.mxu0 0
        %1315 = vmatpush1.bf16.xpose.msra.mxu0 0
        %1316 = vmatprep.subr.bf16.mxu0 0
        %1317 = vmatpush1.bf16.xpose.msra.mxu0 0
        %1318 = vmatprep.subr.bf16.mxu0 0
        %1319 = vmatpush1.bf16.xpose.msra.mxu0 0
        %1320 = vmatprep.subr.bf16.mxu0 0
        %1321 = vmatpush1.bf16.xpose.msra.mxu0 0
        %1322 = vmatprep.subr.bf16.mxu0 0
        %1323 = vmatpush1.bf16.xpose.msra.mxu0 0
        %1324 = vmatprep.subr.bf16.mxu0 0
        %1325 = vmatpush1.bf16.xpose.msra.mxu0 0
        %1326 = vmatprep.subr.bf16.mxu0 0
        %1327 = vmatpush1.bf16.xpose.msra.mxu0 0
        %1328 = vmatprep.subr.bf16.mxu0 0
        %1329 = vmatpush1.bf16.xpose.msra.mxu0 0
        %1330 = vmatprep.subr.bf16.mxu0 0
        %1331 = vmatpush1.bf16.xpose.msra.mxu0 0
        %1332 = vmatprep.subr.bf16.mxu0 0
        %1333 = vmatpush1.bf16.xpose.msra.mxu0 0
        %1334 = vmatprep.subr.bf16.mxu0 0
        %1335 = vmatpush1.bf16.xpose.msra.mxu0 0
        %1336 = vmatprep.subr.bf16.mxu0 0
        %1337 = vmatpush1.bf16.xpose.msra.mxu0 0
        %1338 = vmatprep.subr.bf16.mxu0 0
        %1339 = vmatpush1.bf16.xpose.msra.mxu0 0
        %1340 = vmatprep.subr.bf16.mxu0 0
        %1341 = vmatpush1.bf16.xpose.msra.mxu0 0
        %1342 = vmatprep.subr.bf16.mxu0 0
        %1343 = vmatpush1.bf16.xpose.msra.mxu0 0
        %1344 = vmatprep.mubr.bf16.mxu0 0
        %1345 = vmatmul.mubr.bf16.gmra.mrb[0].mxu0 %v1307
        %v1346 = vpop.f32.mrb[0].mxu0
        %v1347 = vadd.f32 0.0, %v1346
        %v1348 = vpop.f32.mrb[0].mxu0
        %v1349 = vpop.f32.mrb[0].mxu0
        %v1350 = vpop.f32.mrb[0].mxu0
        %1351 = vdwg.mxu0
        %v1353 = vsel %vm1305, %v993, 0
        %v1356 = vsel %vm1305, %v1152, 0
        %1358 = vmatprep.subr.bf16.mxu0 0
        %1359 = vmatpush1.bf16.xpose.msra.mxu0 %v1356
        %1360 = vmatprep.subr.bf16.mxu0 0
        %1361 = vmatpush1.bf16.xpose.msra.mxu0 0
        %1362 = vmatprep.subr.bf16.mxu0 0
        %1363 = vmatpush1.bf16.xpose.msra.mxu0 0
        %1364 = vmatprep.subr.bf16.mxu0 0
        %1365 = vmatpush1.bf16.xpose.msra.mxu0 0
        %1366 = vmatprep.subr.bf16.mxu0 0
        %1367 = vmatpush1.bf16.xpose.msra.mxu0 0
        %1368 = vmatprep.subr.bf16.mxu0 0
        %1369 = vmatpush1.bf16.xpose.msra.mxu0 0
        %1370 = vmatprep.subr.bf16.mxu0 0
        %1371 = vmatpush1.bf16.xpose.msra.mxu0 0
        %1372 = vmatprep.subr.bf16.mxu0 0
        %1373 = vmatpush1.bf16.xpose.msra.mxu0 0
        %1374 = vmatprep.subr.bf16.mxu0 0
        %1375 = vmatpush1.bf16.xpose.msra.mxu0 0
        %1376 = vmatprep.subr.bf16.mxu0 0
        %1377 = vmatpush1.bf16.xpose.msra.mxu0 0
        %1378 = vmatprep.subr.bf16.mxu0 0
        %1379 = vmatpush1.bf16.xpose.msra.mxu0 0
        %1380 = vmatprep.subr.bf16.mxu0 0
        %1381 = vmatpush1.bf16.xpose.msra.mxu0 0
        %1382 = vmatprep.subr.bf16.mxu0 0
        %1383 = vmatpush1.bf16.xpose.msra.mxu0 0
        %1384 = vmatprep.subr.bf16.mxu0 0
        %1385 = vmatpush1.bf16.xpose.msra.mxu0 0
        %1386 = vmatprep.subr.bf16.mxu0 0
        %1387 = vmatpush1.bf16.xpose.msra.mxu0 0
        %1388 = vmatprep.subr.bf16.mxu0 0
        %1389 = vmatpush1.bf16.xpose.msra.mxu0 0
        %1390 = vmatprep.mubr.bf16.mxu0 0
        %1391 = vmatmul.mubr.bf16.gmra.mrb[0].mxu0 %v1353
        %v1392 = vpop.f32.mrb[0].mxu0
        %v1393 = vadd.f32 0.0, %v1392
        %v1394 = vpop.f32.mrb[0].mxu0
        %v1395 = vpop.f32.mrb[0].mxu0
        %v1396 = vpop.f32.mrb[0].mxu0
        %1397 = vdwg.mxu0
        %v1399 = vsel %vm1305, %v994, 0
        %v1402 = vsel %vm1305, %v1153, 0
        %1404 = vmatprep.subr.bf16.mxu0 0
        %1405 = vmatpush1.bf16.xpose.msra.mxu0 %v1402
        %1406 = vmatprep.subr.bf16.mxu0 0
        %1407 = vmatpush1.bf16.xpose.msra.mxu0 0
        %1408 = vmatprep.subr.bf16.mxu0 0
        %1409 = vmatpush1.bf16.xpose.msra.mxu0 0
        %1410 = vmatprep.subr.bf16.mxu0 0
        %1411 = vmatpush1.bf16.xpose.msra.mxu0 0
        %1412 = vmatprep.subr.bf16.mxu0 0
        %1413 = vmatpush1.bf16.xpose.msra.mxu0 0
        %1414 = vmatprep.subr.bf16.mxu0 0
        %1415 = vmatpush1.bf16.xpose.msra.mxu0 0
        %1416 = vmatprep.subr.bf16.mxu0 0
        %1417 = vmatpush1.bf16.xpose.msra.mxu0 0
        %1418 = vmatprep.subr.bf16.mxu0 0
        %1419 = vmatpush1.bf16.xpose.msra.mxu0 0
        %1420 = vmatprep.subr.bf16.mxu0 0
        %1421 = vmatpush1.bf16.xpose.msra.mxu0 0
        %1422 = vmatprep.subr.bf16.mxu0 0
        %1423 = vmatpush1.bf16.xpose.msra.mxu0 0
        %1424 = vmatprep.subr.bf16.mxu0 0
        %1425 = vmatpush1.bf16.xpose.msra.mxu0 0
        %1426 = vmatprep.subr.bf16.mxu0 0
        %1427 = vmatpush1.bf16.xpose.msra.mxu0 0
        %1428 = vmatprep.subr.bf16.mxu0 0
        %1429 = vmatpush1.bf16.xpose.msra.mxu0 0
        %1430 = vmatprep.subr.bf16.mxu0 0
        %1431 = vmatpush1.bf16.xpose.msra.mxu0 0
        %1432 = vmatprep.subr.bf16.mxu0 0
        %1433 = vmatpush1.bf16.xpose.msra.mxu0 0
        %1434 = vmatprep.subr.bf16.mxu0 0
        %1435 = vmatpush1.bf16.xpose.msra.mxu0 0
        %1436 = vmatprep.mubr.bf16.mxu0 0
        %1437 = vmatmul.mubr.bf16.gmra.mrb[0].mxu0 %v1399
        %v1438 = vpop.f32.mrb[0].mxu0
        %v1439 = vadd.f32 0.0, %v1438
        %v1440 = vpop.f32.mrb[0].mxu0
        %v1441 = vpop.f32.mrb[0].mxu0
        %v1442 = vpop.f32.mrb[0].mxu0
        %1443 = vdwg.mxu0
        %v1445 = vsel %vm1305, %v995, 0
        %v1448 = vsel %vm1305, %v1154, 0
        %1450 = vmatprep.subr.bf16.mxu0 0
        %1451 = vmatpush1.bf16.xpose.msra.mxu0 %v1448
        %1452 = vmatprep.subr.bf16.mxu0 0
        %1453 = vmatpush1.bf16.xpose.msra.mxu0 0
        %1454 = vmatprep.subr.bf16.mxu0 0
        %1455 = vmatpush1.bf16.xpose.msra.mxu0 0
        %1456 = vmatprep.subr.bf16.mxu0 0
        %1457 = vmatpush1.bf16.xpose.msra.mxu0 0
        %1458 = vmatprep.subr.bf16.mxu0 0
        %1459 = vmatpush1.bf16.xpose.msra.mxu0 0
        %1460 = vmatprep.subr.bf16.mxu0 0
        %1461 = vmatpush1.bf16.xpose.msra.mxu0 0
        %1462 = vmatprep.subr.bf16.mxu0 0
        %1463 = vmatpush1.bf16.xpose.msra.mxu0 0
        %1464 = vmatprep.subr.bf16.mxu0 0
        %1465 = vmatpush1.bf16.xpose.msra.mxu0 0
        %1466 = vmatprep.subr.bf16.mxu0 0
        %1467 = vmatpush1.bf16.xpose.msra.mxu0 0
        %1468 = vmatprep.subr.bf16.mxu0 0
        %1469 = vmatpush1.bf16.xpose.msra.mxu0 0
        %1470 = vmatprep.subr.bf16.mxu0 0
        %1471 = vmatpush1.bf16.xpose.msra.mxu0 0
        %1472 = vmatprep.subr.bf16.mxu0 0
        %1473 = vmatpush1.bf16.xpose.msra.mxu0 0
        %1474 = vmatprep.subr.bf16.mxu0 0
        %1475 = vmatpush1.bf16.xpose.msra.mxu0 0
        %1476 = vmatprep.subr.bf16.mxu0 0
        %1477 = vmatpush1.bf16.xpose.msra.mxu0 0
        %1478 = vmatprep.subr.bf16.mxu0 0
        %1479 = vmatpush1.bf16.xpose.msra.mxu0 0
        %1480 = vmatprep.subr.bf16.mxu0 0
        %1481 = vmatpush1.bf16.xpose.msra.mxu0 0
        %1482 = vmatprep.mubr.bf16.mxu0 0
        %1483 = vmatmul.mubr.bf16.gmra.mrb[0].mxu0 %v1445
        %v1484 = vpop.f32.mrb[0].mxu0
        %v1485 = vadd.f32 0.0, %v1484
        %v1486 = vpop.f32.mrb[0].mxu0
        %v1487 = vpop.f32.mrb[0].mxu0
        %v1488 = vpop.f32.mrb[0].mxu0
        %1489 = vdwg.mxu0
        %v1490 = vlaneseq
        %v1491 = vshrl.u32 %v1490, 7
        %v1492 = vlaneseq
        %v1493 = vand.u32 %v1492, 127
        %vm1494 = vcmp.le.s32.totalorder %v1493, %v1491
        %v1495 = vsel %vm1494, 1, 0
        %vm1496 = vcmp.eq.s32.totalorder %v1495, 1
        %v1497 = vsel %vm1496, %v1347, -1e+09
        %v1498 = vsel %vm1496, %v1393, -1e+09
        %v1499 = vsel %vm1496, %v1439, -1e+09
        %v1500 = vsel %vm1496, %v1485, -1e+09
        %vm1501 = vcmask 64512
        %v1502 = vsel %vm1501, %v1497, -inf
        %1503 = vmax.xlane.f32.xlu0 %v1502
        %v1504 = vpop.xlane.xlu0 %1503
        %v1505 = vsel %vm1501, %v1498, -inf
        %1506 = vmax.xlane.f32.xlu0 %v1505
        %v1507 = vpop.xlane.xlu0 %1506
        %v1508 = vsel %vm1501, %v1499, -inf
        %1509 = vmax.xlane.f32.xlu0 %v1508
        %v1510 = vpop.xlane.xlu0 %1509
        %v1511 = vsel %vm1501, %v1500, -inf
        %1512 = vmax.xlane.f32.xlu0 %v1511
        %v1513 = vpop.xlane.xlu0 %1512
        %v1514 = vsub.f32 %v1497, %v1504
        %v1515 = vsub.f32 %v1498, %v1507
        %v1516 = vsub.f32 %v1499, %v1510
        %v1517 = vsub.f32 %v1500, %v1513
        %v1518 = vmul.f32 %v1514, 1.442695
        %v1519 = vpow.pop %v1518
        %v1520 = vmul.f32 %v1515, 1.442695
        %v1521 = vpow.pop %v1520
        %v1522 = vmul.f32 %v1516, 1.442695
        %v1523 = vpow.pop %v1522
        %v1524 = vmul.f32 %v1517, 1.442695
        %v1525 = vpow.pop %v1524
        %v1526 = vsel %vm1501, %v1519, 0.0
        %1527 = vadd.xlane.f32.xlu0 %v1526
        %v1528 = vpop.xlane.xlu0 %1527
        %v1529 = vsel %vm1501, %v1521, 0.0
        %1530 = vadd.xlane.f32.xlu0 %v1529
        %v1531 = vpop.xlane.xlu0 %1530
        %v1532 = vsel %vm1501, %v1523, 0.0
        %1533 = vadd.xlane.f32.xlu0 %v1532
        %v1534 = vpop.xlane.xlu0 %1533
        %v1535 = vsel %vm1501, %v1525, 0.0
        %1536 = vadd.xlane.f32.xlu0 %v1535
        %v1537 = vpop.xlane.xlu0 %1536
        %v1538 = vrcp.pop %v1528
        %v1539 = vrcp.pop %v1531
        %v1540 = vrcp.pop %v1534
        %v1541 = vrcp.pop %v1537
        %v1542 = vmul.f32 %v1519, %v1538
        %v1543 = vmul.f32 %v1521, %v1539
        %v1544 = vmul.f32 %v1523, %v1540
        %v1545 = vmul.f32 %v1525, %v1541
        %v1546 = vpack.c.bf16 %v1542, %v1542
        %v1547 = vpack.c.bf16 %v1543, %v1543
        %v1548 = vpack.c.bf16 %v1544, %v1544
        %v1549 = vpack.c.bf16 %v1545, %v1545
        %v1551 = vsel %vm1501, %v1546, 0
        %vm1553 = vcmask 1043456
        %v1555 = vsel %vm1553, %v1301, 0
        %1557 = vmatprep.subr.bf16.mxu0 0
        %1558 = vmatpush1.bf16.msra.mxu0 %v1555
        %1559 = vmatprep.subr.bf16.mxu0 0
        %1560 = vmatpush1.bf16.msra.mxu0 0
        %1561 = vmatprep.subr.bf16.mxu0 0
        %1562 = vmatpush1.bf16.msra.mxu0 0
        %1563 = vmatprep.subr.bf16.mxu0 0
        %1564 = vmatpush1.bf16.msra.mxu0 0
        %1565 = vmatprep.subr.bf16.mxu0 0
        %1566 = vmatpush1.bf16.msra.mxu0 0
        %1567 = vmatprep.subr.bf16.mxu0 0
        %1568 = vmatpush1.bf16.msra.mxu0 0
        %1569 = vmatprep.subr.bf16.mxu0 0
        %1570 = vmatpush1.bf16.msra.mxu0 0
        %1571 = vmatprep.subr.bf16.mxu0 0
        %1572 = vmatpush1.bf16.msra.mxu0 0
        %1573 = vmatprep.subr.bf16.mxu0 0
        %1574 = vmatpush1.bf16.msra.mxu0 0
        %1575 = vmatprep.subr.bf16.mxu0 0
        %1576 = vmatpush1.bf16.msra.mxu0 0
        %1577 = vmatprep.subr.bf16.mxu0 0
        %1578 = vmatpush1.bf16.msra.mxu0 0
        %1579 = vmatprep.subr.bf16.mxu0 0
        %1580 = vmatpush1.bf16.msra.mxu0 0
        %1581 = vmatprep.subr.bf16.mxu0 0
        %1582 = vmatpush1.bf16.msra.mxu0 0
        %1583 = vmatprep.subr.bf16.mxu0 0
        %1584 = vmatpush1.bf16.msra.mxu0 0
        %1585 = vmatprep.subr.bf16.mxu0 0
        %1586 = vmatpush1.bf16.msra.mxu0 0
        %1587 = vmatprep.subr.bf16.mxu0 0
        %1588 = vmatpush1.bf16.msra.mxu0 0
        %1589 = vmatprep.mubr.bf16.mxu0 0
        %1590 = vmatmul.mubr.bf16.gmra.mrb[0].mxu0 %v1551
        %v1591 = vpop.f32.mrb[0].mxu0
        %v1592 = vadd.f32 0.0, %v1591
        %v1593 = vpop.f32.mrb[0].mxu0
        %v1594 = vpop.f32.mrb[0].mxu0
        %v1595 = vpop.f32.mrb[0].mxu0
        %1596 = vdwg.mxu0
        %v1598 = vsel %vm1501, %v1547, 0
        %v1601 = vsel %vm1553, %v1302, 0
        %1603 = vmatprep.subr.bf16.mxu0 0
        %1604 = vmatpush1.bf16.msra.mxu0 %v1601
        %1605 = vmatprep.subr.bf16.mxu0 0
        %1606 = vmatpush1.bf16.msra.mxu0 0
        %1607 = vmatprep.subr.bf16.mxu0 0
        %1608 = vmatpush1.bf16.msra.mxu0 0
        %1609 = vmatprep.subr.bf16.mxu0 0
        %1610 = vmatpush1.bf16.msra.mxu0 0
        %1611 = vmatprep.subr.bf16.mxu0 0
        %1612 = vmatpush1.bf16.msra.mxu0 0
        %1613 = vmatprep.subr.bf16.mxu0 0
        %1614 = vmatpush1.bf16.msra.mxu0 0
        %1615 = vmatprep.subr.bf16.mxu0 0
        %1616 = vmatpush1.bf16.msra.mxu0 0
        %1617 = vmatprep.subr.bf16.mxu0 0
        %1618 = vmatpush1.bf16.msra.mxu0 0
        %1619 = vmatprep.subr.bf16.mxu0 0
        %1620 = vmatpush1.bf16.msra.mxu0 0
        %1621 = vmatprep.subr.bf16.mxu0 0
        %1622 = vmatpush1.bf16.msra.mxu0 0
        %1623 = vmatprep.subr.bf16.mxu0 0
        %1624 = vmatpush1.bf16.msra.mxu0 0
        %1625 = vmatprep.subr.bf16.mxu0 0
        %1626 = vmatpush1.bf16.msra.mxu0 0
        %1627 = vmatprep.subr.bf16.mxu0 0
        %1628 = vmatpush1.bf16.msra.mxu0 0
        %1629 = vmatprep.subr.bf16.mxu0 0
        %1630 = vmatpush1.bf16.msra.mxu0 0
        %1631 = vmatprep.subr.bf16.mxu0 0
        %1632 = vmatpush1.bf16.msra.mxu0 0
        %1633 = vmatprep.subr.bf16.mxu0 0
        %1634 = vmatpush1.bf16.msra.mxu0 0
        %1635 = vmatprep.mubr.bf16.mxu0 0
        %1636 = vmatmul.mubr.bf16.gmra.mrb[0].mxu0 %v1598
        %v1637 = vpop.f32.mrb[0].mxu0
        %v1638 = vadd.f32 0.0, %v1637
        %v1639 = vpop.f32.mrb[0].mxu0
        %v1640 = vpop.f32.mrb[0].mxu0
        %v1641 = vpop.f32.mrb[0].mxu0
        %1642 = vdwg.mxu0
        %v1644 = vsel %vm1501, %v1548, 0
        %v1647 = vsel %vm1553, %v1303, 0
        %1649 = vmatprep.subr.bf16.mxu0 0
        %1650 = vmatpush1.bf16.msra.mxu0 %v1647
        %1651 = vmatprep.subr.bf16.mxu0 0
        %1652 = vmatpush1.bf16.msra.mxu0 0
        %1653 = vmatprep.subr.bf16.mxu0 0
        %1654 = vmatpush1.bf16.msra.mxu0 0
        %1655 = vmatprep.subr.bf16.mxu0 0
        %1656 = vmatpush1.bf16.msra.mxu0 0
        %1657 = vmatprep.subr.bf16.mxu0 0
        %1658 = vmatpush1.bf16.msra.mxu0 0
        %1659 = vmatprep.subr.bf16.mxu0 0
        %1660 = vmatpush1.bf16.msra.mxu0 0
        %1661 = vmatprep.subr.bf16.mxu0 0
        %1662 = vmatpush1.bf16.msra.mxu0 0
        %1663 = vmatprep.subr.bf16.mxu0 0
        %1664 = vmatpush1.bf16.msra.mxu0 0
        %1665 = vmatprep.subr.bf16.mxu0 0
        %1666 = vmatpush1.bf16.msra.mxu0 0
        %1667 = vmatprep.subr.bf16.mxu0 0
        %1668 = vmatpush1.bf16.msra.mxu0 0
        %1669 = vmatprep.subr.bf16.mxu0 0
        %1670 = vmatpush1.bf16.msra.mxu0 0
        %1671 = vmatprep.subr.bf16.mxu0 0
        %1672 = vmatpush1.bf16.msra.mxu0 0
        %1673 = vmatprep.subr.bf16.mxu0 0
        %1674 = vmatpush1.bf16.msra.mxu0 0
        %1675 = vmatprep.subr.bf16.mxu0 0
        %1676 = vmatpush1.bf16.msra.mxu0 0
        %1677 = vmatprep.subr.bf16.mxu0 0
        %1678 = vmatpush1.bf16.msra.mxu0 0
        %1679 = vmatprep.subr.bf16.mxu0 0
        %1680 = vmatpush1.bf16.msra.mxu0 0
        %1681 = vmatprep.mubr.bf16.mxu0 0
        %1682 = vmatmul.mubr.bf16.gmra.mrb[0].mxu0 %v1644
        %v1683 = vpop.f32.mrb[0].mxu0
        %v1684 = vadd.f32 0.0, %v1683
        %v1685 = vpop.f32.mrb[0].mxu0
        %v1686 = vpop.f32.mrb[0].mxu0
        %v1687 = vpop.f32.mrb[0].mxu0
        %1688 = vdwg.mxu0
        %v1690 = vsel %vm1501, %v1549, 0
        %v1693 = vsel %vm1553, %v1304, 0
        %1695 = vmatprep.subr.bf16.mxu0 0
        %1696 = vmatpush1.bf16.msra.mxu0 %v1693
        %1697 = vmatprep.subr.bf16.mxu0 0
        %1698 = vmatpush1.bf16.msra.mxu0 0
        %1699 = vmatprep.subr.bf16.mxu0 0
        %1700 = vmatpush1.bf16.msra.mxu0 0
        %1701 = vmatprep.subr.bf16.mxu0 0
        %1702 = vmatpush1.bf16.msra.mxu0 0
        %1703 = vmatprep.subr.bf16.mxu0 0
        %1704 = vmatpush1.bf16.msra.mxu0 0
        %1705 = vmatprep.subr.bf16.mxu0 0
        %1706 = vmatpush1.bf16.msra.mxu0 0
        %1707 = vmatprep.subr.bf16.mxu0 0
        %1708 = vmatpush1.bf16.msra.mxu0 0
        %1709 = vmatprep.subr.bf16.mxu0 0
        %1710 = vmatpush1.bf16.msra.mxu0 0
        %1711 = vmatprep.subr.bf16.mxu0 0
        %1712 = vmatpush1.bf16.msra.mxu0 0
        %1713 = vmatprep.subr.bf16.mxu0 0
        %1714 = vmatpush1.bf16.msra.mxu0 0
        %1715 = vmatprep.subr.bf16.mxu0 0
        %1716 = vmatpush1.bf16.msra.mxu0 0
        %1717 = vmatprep.subr.bf16.mxu0 0
        %1718 = vmatpush1.bf16.msra.mxu0 0
        %1719 = vmatprep.subr.bf16.mxu0 0
        %1720 = vmatpush1.bf16.msra.mxu0 0
        %1721 = vmatprep.subr.bf16.mxu0 0
        %1722 = vmatpush1.bf16.msra.mxu0 0
        %1723 = vmatprep.subr.bf16.mxu0 0
        %1724 = vmatpush1.bf16.msra.mxu0 0
        %1725 = vmatprep.subr.bf16.mxu0 0
        %1726 = vmatpush1.bf16.msra.mxu0 0
        %1727 = vmatprep.mubr.bf16.mxu0 0
        %1728 = vmatmul.mubr.bf16.gmra.mrb[0].mxu0 %v1690
        %v1729 = vpop.f32.mrb[0].mxu0
        %v1730 = vadd.f32 0.0, %v1729
        %v1731 = vpop.f32.mrb[0].mxu0
        %v1732 = vpop.f32.mrb[0].mxu0
        %v1733 = vpop.f32.mrb[0].mxu0
        %1734 = vdwg.mxu0
        %v1735 = vcombine.low %v1592, %v1684
        %v1736 = vcombine.high %v1592, %v1684
        %v1738 = vunpack.c.l.s4 1983009808
        %v1739 = vunpack.c.0.s8 %v1738
        %v1740 = vlaneseq
        %v1741 = vshrl.u32 %v1740, 7
        %v1742 = vsub.s32 %v1739, %v1741
        %v1743 = vrot.slane %v1735, %v1742
        %v1745 = vunpack.c.l.s4 1983009808
        %v1746 = vunpack.c.0.s8 %v1745
        %v1747 = vlaneseq
        %v1748 = vshrl.u32 %v1747, 7
        %v1749 = vsub.s32 %v1746, %v1748
        %v1750 = vrot.slane %v1736, %v1749
        %v1751 = vcombine.low %v1638, %v1730
        %v1752 = vcombine.high %v1638, %v1730
        %v1754 = vunpack.c.l.s4 1983009808
        %v1755 = vunpack.c.0.s8 %v1754
        %v1756 = vlaneseq
        %v1757 = vshrl.u32 %v1756, 7
        %v1758 = vsub.s32 %v1755, %v1757
        %v1759 = vrot.slane %v1751, %v1758
        %v1761 = vunpack.c.l.s4 1983009808
        %v1762 = vunpack.c.0.s8 %v1761
        %v1763 = vlaneseq
        %v1764 = vshrl.u32 %v1763, 7
        %v1765 = vsub.s32 %v1762, %v1764
        %v1766 = vrot.slane %v1752, %v1765
        %v1767 = vcombine.low %v1743, %v1759
        %v1768 = vcombine.high %v1743, %v1759
        %v1770 = vunpack.c.l.s4 1934713408
        %v1771 = vunpack.c.0.s8 %v1770
        %v1772 = vlaneseq
        %v1773 = vshrl.u32 %v1772, 7
        %v1774 = vsub.s32 %v1771, %v1773
        %v1775 = vrot.slane %v1767, %v1774
        %v1777 = vunpack.c.l.s4 1934713408
        %v1778 = vunpack.c.0.s8 %v1777
        %v1779 = vlaneseq
        %v1780 = vshrl.u32 %v1779, 7
        %v1781 = vsub.s32 %v1778, %v1780
        %v1782 = vrot.slane %v1768, %v1781
        %v1783 = vcombine.low %v1750, %v1766
        %v1784 = vcombine.high %v1750, %v1766
        %v1786 = vunpack.c.l.s4 1934713408
        %v1787 = vunpack.c.0.s8 %v1786
        %v1788 = vlaneseq
        %v1789 = vshrl.u32 %v1788, 7
        %v1790 = vsub.s32 %v1787, %v1789
        %v1791 = vrot.slane %v1783, %v1790
        %v1793 = vunpack.c.l.s4 1934713408
        %v1794 = vunpack.c.0.s8 %v1793
        %v1795 = vlaneseq
        %v1796 = vshrl.u32 %v1795, 7
        %v1797 = vsub.s32 %v1794, %v1796
        %v1798 = vrot.slane %v1784, %v1797
        %v1799 = vcombine.high %v1775, 0.0
        %v1800 = vcombine.high %v1782, 0.0
        %v1801 = vcombine.high %v1791, 0.0
        %v1802 = vcombine.high %v1798, 0.0
        %v1803 = vcombine.low %v1775, %v1782
        %v1805 = vunpack.c.l.s4 1983009808
        %v1806 = vunpack.c.0.s8 %v1805
        %v1807 = vlaneseq
        %v1808 = vshrl.u32 %v1807, 7
        %v1809 = vsub.s32 %v1806, %v1808
        %v1810 = vrot.slane %v1803, %v1809
        %v1811 = vcombine.low %v1799, %v1800
        %v1813 = vunpack.c.l.s4 1983009808
        %v1814 = vunpack.c.0.s8 %v1813
        %v1815 = vlaneseq
        %v1816 = vshrl.u32 %v1815, 7
        %v1817 = vsub.s32 %v1814, %v1816
        %v1818 = vrot.slane %v1811, %v1817
        %v1819 = vcombine.low %v1791, %v1798
        %v1821 = vunpack.c.l.s4 1983009808
        %v1822 = vunpack.c.0.s8 %v1821
        %v1823 = vlaneseq
        %v1824 = vshrl.u32 %v1823, 7
        %v1825 = vsub.s32 %v1822, %v1824
        %v1826 = vrot.slane %v1819, %v1825
        %v1827 = vcombine.low %v1801, %v1802
        %v1829 = vunpack.c.l.s4 1983009808
        %v1830 = vunpack.c.0.s8 %v1829
        %v1831 = vlaneseq
        %v1832 = vshrl.u32 %v1831, 7
        %v1833 = vsub.s32 %v1830, %v1832
        %v1834 = vrot.slane %v1827, %v1833
        %v1835 = vcombine.low %v1810, %v1818
        %v1836 = vcombine.high %v1810, %v1818
        %v1838 = vunpack.c.l.s4 1934713408
        %v1839 = vunpack.c.0.s8 %v1838
        %v1840 = vlaneseq
        %v1841 = vshrl.u32 %v1840, 7
        %v1842 = vsub.s32 %v1839, %v1841
        %v1843 = vrot.slane %v1835, %v1842
        %v1845 = vunpack.c.l.s4 1934713408
        %v1846 = vunpack.c.0.s8 %v1845
        %v1847 = vlaneseq
        %v1848 = vshrl.u32 %v1847, 7
        %v1849 = vsub.s32 %v1846, %v1848
        %v1850 = vrot.slane %v1836, %v1849
        %v1851 = vcombine.low %v1826, %v1834
        %v1852 = vcombine.high %v1826, %v1834
        %v1854 = vunpack.c.l.s4 1934713408
        %v1855 = vunpack.c.0.s8 %v1854
        %v1856 = vlaneseq
        %v1857 = vshrl.u32 %v1856, 7
        %v1858 = vsub.s32 %v1855, %v1857
        %v1859 = vrot.slane %v1851, %v1858
        %v1861 = vunpack.c.l.s4 1934713408
        %v1862 = vunpack.c.0.s8 %v1861
        %v1863 = vlaneseq
        %v1864 = vshrl.u32 %v1863, 7
        %v1865 = vsub.s32 %v1862, %v1864
        %v1866 = vrot.slane %v1852, %v1865
        %v1867 = vcombine.low %v1843, %v1859
        %v1868 = vcombine.high %v1843, %v1859
        %v1869 = vcombine.low %v1850, %v1866
        %v1870 = vcombine.high %v1850, %v1866
        %1872 = vrot.lane.b32.xlu0 %v1868, 16
        %v1873 = vpop.permute.xlu0 %1872
        %1876 = vrot.lane.b32.xlu0 %v1869, 32
        %v1877 = vpop.permute.xlu0 %1876
        %1880 = vrot.lane.b32.xlu0 %v1870, 48
        %v1881 = vpop.permute.xlu0 %1880
        %v1883 = vsel %vm1305, %v1867, %v1873
        %vm1884 = vcmask 261120
        %v1885 = vsel %vm1884, %v1883, %v1877
        %vm1886 = vcmask 392192
        %v1887 = vsel %vm1886, %v1885, %v1881
        %v1888 = vpack.c.bf16 %v1887, %v1887
        %v1889 = vld [vmem:[%s673] sm:$0xf]
        %v1890 = vld [vmem:[%s673 + $0x4] sm:$0xf]
        %v1891 = vld [vmem:[%s673 + $0x8] sm:$0xf]
        %v1892 = vld [vmem:[%s673 + $0xc] sm:$0xf]
        %v1893 = vld [vmem:[%s673 + $0x10] sm:$0xf]
        %v1894 = vld [vmem:[%s673 + $0x14] sm:$0xf]
        %v1895 = vld [vmem:[%s673 + $0x18] sm:$0xf]
        %v1896 = vld [vmem:[%s673 + $0x1c] sm:$0xf]
        %v1897 = vld [vmem:[%s676] sm:$0x1]
        %v1899 = vlaneseq
        %v1900 = vshrl.u32 %v1899, 7
        %v1901 = vsub.s32 0, %v1900
        %v1902 = vrot.slane %v1897, %v1901
        %v1912 = vunpack.c.l.b16 %v1889
        %v1913 = vunpack.c.l.b16 %v1890
        %v1914 = vunpack.c.l.b16 %v1891
        %v1915 = vunpack.c.l.b16 %v1892
        %v1916 = vunpack.c.l.b16 %v1893
        %v1917 = vunpack.c.l.b16 %v1894
        %v1918 = vunpack.c.l.b16 %v1895
        %v1919 = vunpack.c.l.b16 %v1896
        %v1920 = vpack.c.b16 %v1913, %v1912
        %v1921 = vpack.c.b16 %v1915, %v1914
        %v1922 = vpack.c.b16 %v1917, %v1916
        %v1923 = vpack.c.b16 %v1919, %v1918
        %v1929 = vsel %vm711, %v1888, 0
        %1931 = vmatprep.subr.bf16.mxu0 0
        %1932 = vmatpush1.bf16.msra.mxu0 %v1920
        %1933 = vmatprep.subr.bf16.mxu0 0
        %1934 = vmatpush1.bf16.msra.mxu0 %v1921
        %1935 = vmatprep.subr.bf16.mxu0 0
        %1936 = vmatpush1.bf16.msra.mxu0 %v1922
        %1937 = vmatprep.subr.bf16.mxu0 0
        %1938 = vmatpush1.bf16.msra.mxu0 %v1923
        %1939 = vmatprep.subr.bf16.mxu0 0
        %1940 = vmatpush1.bf16.msra.mxu0 0
        %1941 = vmatprep.subr.bf16.mxu0 0
        %1942 = vmatpush1.bf16.msra.mxu0 0
        %1943 = vmatprep.subr.bf16.mxu0 0
        %1944 = vmatpush1.bf16.msra.mxu0 0
        %1945 = vmatprep.subr.bf16.mxu0 0
        %1946 = vmatpush1.bf16.msra.mxu0 0
        %1947 = vmatprep.subr.bf16.mxu0 0
        %1948 = vmatpush1.bf16.msra.mxu0 0
        %1949 = vmatprep.subr.bf16.mxu0 0
        %1950 = vmatpush1.bf16.msra.mxu0 0
        %1951 = vmatprep.subr.bf16.mxu0 0
        %1952 = vmatpush1.bf16.msra.mxu0 0
        %1953 = vmatprep.subr.bf16.mxu0 0
        %1954 = vmatpush1.bf16.msra.mxu0 0
        %1955 = vmatprep.subr.bf16.mxu0 0
        %1956 = vmatpush1.bf16.msra.mxu0 0
        %1957 = vmatprep.subr.bf16.mxu0 0
        %1958 = vmatpush1.bf16.msra.mxu0 0
        %1959 = vmatprep.subr.bf16.mxu0 0
        %1960 = vmatpush1.bf16.msra.mxu0 0
        %1961 = vmatprep.subr.bf16.mxu0 0
        %1962 = vmatpush1.bf16.msra.mxu0 0
        %1963 = vmatprep.mubr.bf16.mxu0 0
        %1964 = vmatmul.mubr.bf16.gmra.mrb[0].mxu0 %v1929
        %v1965 = vpop.f32.mrb[0].mxu0
        %v1966 = vadd.f32 %v1902, %v1965
        %v1967 = vpop.f32.mrb[0].mxu0
        %v1968 = vpop.f32.mrb[0].mxu0
        %v1969 = vpop.f32.mrb[0].mxu0
        %1970 = vdwg.mxu0
        %v1971 = vadd.f32 %v708, %v1966
        %v1972 = vld [vmem:[%s679] sm:$0x1]
        %v1973 = vld [vmem:[%s682] sm:$0x1]
        %v1974 = vsel %vm711, %v1971, 0.0
        %1975 = vadd.xlane.f32.xlu0 %v1974
        %v1976 = vpop.xlane.xlu0 %1975
        %v1977 = vmul.f32 %v1976, %v715
        %v1978 = vsub.f32 %v1971, %v1977
        %v1979 = vmul.f32 %v1978, %v1978
        %v1980 = vsel %vm711, %v1979, 0.0
        %1981 = vadd.xlane.f32.xlu0 %v1980
        %v1982 = vpop.xlane.xlu0 %1981
        %v1983 = vmul.f32 %v1982, %v715
        %v1984 = vadd.f32 %v1983, 1e-05
        %v1985 = vrsqrt.pop %v1984
        %v1986 = vmul.f32 %v1978, %v1985
        %v1988 = vlaneseq
        %v1989 = vshrl.u32 %v1988, 7
        %v1990 = vsub.s32 0, %v1989
        %v1991 = vrot.slane %v1972, %v1990
        %v1993 = vmul.f32 %v1986, %v1991
        %v1995 = vlaneseq
        %v1996 = vshrl.u32 %v1995, 7
        %v1997 = vsub.s32 0, %v1996
        %v1998 = vrot.slane %v1973, %v1997
        %v2000 = vadd.f32 %v1993, %v1998
        %v2001 = vpack.c.bf16 %v2000, %v2000
        %v2002 = vld [vmem:[%s687] sm:$0xff]
        %v2003 = vld [vmem:[%s687 + $0x8] sm:$0xff]
        %v2004 = vld [vmem:[%s687 + $0x10] sm:$0xff]
        %v2005 = vld [vmem:[%s687 + $0x18] sm:$0xff]
        %v2006 = vld [vmem:[%s687 + $0x20] sm:$0xff]
        %v2007 = vld [vmem:[%s687 + $0x28] sm:$0xff]
        %v2008 = vld [vmem:[%s687 + $0x30] sm:$0xff]
        %v2009 = vld [vmem:[%s687 + $0x38] sm:$0xff]
        %v2010 = vld [vmem:[%s691] sm:$0x3]
        %v2012 = vlaneseq
        %v2013 = vshrl.u32 %v2012, 7
        %v2014 = vsub.s32 0, %v2013
        %v2015 = vrot.slane %v2010, %v2014
        %v2016 = vlaneseq
        %v2017 = vshrl.u32 %v2016, 7
        %v2018 = vsub.s32 1, %v2017
        %v2019 = vrot.slane %v2010, %v2018
        %v2030 = vunpack.c.l.b16 %v2002
        %v2031 = vunpack.c.h.b16 %v2002
        %v2032 = vunpack.c.l.b16 %v2003
        %v2033 = vunpack.c.h.b16 %v2003
        %v2034 = vunpack.c.l.b16 %v2004
        %v2035 = vunpack.c.h.b16 %v2004
        %v2036 = vunpack.c.l.b16 %v2005
        %v2037 = vunpack.c.h.b16 %v2005
        %v2038 = vunpack.c.l.b16 %v2006
        %v2039 = vunpack.c.h.b16 %v2006
        %v2040 = vunpack.c.l.b16 %v2007
        %v2041 = vunpack.c.h.b16 %v2007
        %v2042 = vunpack.c.l.b16 %v2008
        %v2043 = vunpack.c.h.b16 %v2008
        %v2044 = vunpack.c.l.b16 %v2009
        %v2045 = vunpack.c.h.b16 %v2009
        %v2046 = vpack.c.b16 %v2032, %v2030
        %v2047 = vpack.c.b16 %v2033, %v2031
        %v2048 = vpack.c.b16 %v2036, %v2034
        %v2049 = vpack.c.b16 %v2037, %v2035
        %v2050 = vpack.c.b16 %v2040, %v2038
        %v2051 = vpack.c.b16 %v2041, %v2039
        %v2052 = vpack.c.b16 %v2044, %v2042
        %v2053 = vpack.c.b16 %v2045, %v2043
        %v2063 = vsel %vm711, %v2001, 0
        %2065 = vmatprep.subr.bf16.mxu0 %v2047
        %2066 = vmatpush1.bf16.msra.mxu0 %v2046
        %2067 = vmatprep.subr.bf16.mxu0 %v2049
        %2068 = vmatpush1.bf16.msra.mxu0 %v2048
        %2069 = vmatprep.subr.bf16.mxu0 %v2051
        %2070 = vmatpush1.bf16.msra.mxu0 %v2050
        %2071 = vmatprep.subr.bf16.mxu0 %v2053
        %2072 = vmatpush1.bf16.msra.mxu0 %v2052
        %2073 = vmatprep.subr.bf16.mxu0 0
        %2074 = vmatpush1.bf16.msra.mxu0 0
        %2075 = vmatprep.subr.bf16.mxu0 0
        %2076 = vmatpush1.bf16.msra.mxu0 0
        %2077 = vmatprep.subr.bf16.mxu0 0
        %2078 = vmatpush1.bf16.msra.mxu0 0
        %2079 = vmatprep.subr.bf16.mxu0 0
        %2080 = vmatpush1.bf16.msra.mxu0 0
        %2081 = vmatprep.subr.bf16.mxu0 0
        %2082 = vmatpush1.bf16.msra.mxu0 0
        %2083 = vmatprep.subr.bf16.mxu0 0
        %2084 = vmatpush1.bf16.msra.mxu0 0
        %2085 = vmatprep.subr.bf16.mxu0 0
        %2086 = vmatpush1.bf16.msra.mxu0 0
        %2087 = vmatprep.subr.bf16.mxu0 0
        %2088 = vmatpush1.bf16.msra.mxu0 0
        %2089 = vmatprep.subr.bf16.mxu0 0
        %2090 = vmatpush1.bf16.msra.mxu0 0
        %2091 = vmatprep.subr.bf16.mxu0 0
        %2092 = vmatpush1.bf16.msra.mxu0 0
        %2093 = vmatprep.subr.bf16.mxu0 0
        %2094 = vmatpush1.bf16.msra.mxu0 0
        %2095 = vmatprep.subr.bf16.mxu0 0
        %2096 = vmatpush1.bf16.msra.mxu0 0
        %2097 = vmatprep.mubr.bf16.mxu0 0
        %2098 = vmatmul.mubr.bf16.gmra.mrb[0].mxu0 %v2063
        %v2099 = vpop.f32.mrb[0].mxu0
        %v2100 = vadd.f32 %v2015, %v2099
        %v2101 = vpop.f32.mrb[0].mxu0
        %v2102 = vadd.f32 %v2019, %v2101
        %v2103 = vpop.f32.mrb[0].mxu0
        %v2104 = vpop.f32.mrb[0].mxu0
        %2105 = vdwg.mxu0
        %v2106 = vmul.f32 %v2100, 1.702
        %v2107 = vmul.f32 %v2102, 1.702
        %v2108 = vxor.u32 %v2106, 2147483648
        %v2109 = vxor.u32 %v2107, 2147483648
        %v2110 = vmul.f32 %v2108, 1.442695
        %v2111 = vpow.pop %v2110
        %v2112 = vmul.f32 %v2109, 1.442695
        %v2113 = vpow.pop %v2112
        %v2114 = vadd.f32 %v2111, 1.0
        %v2115 = vadd.f32 %v2113, 1.0
        %v2116 = vrcp.pop %v2114
        %v2117 = vmul.f32 1.0, %v2116
        %v2118 = vrcp.pop %v2115
        %v2119 = vmul.f32 1.0, %v2118
        %v2120 = vmul.f32 %v2100, %v2117
        %v2121 = vmul.f32 %v2102, %v2119
        %v2122 = vpack.c.bf16 %v2120, %v2120
        %v2123 = vpack.c.bf16 %v2121, %v2121
        %v2124 = vld [vmem:[%s696] sm:$0xf]
        %v2125 = vld [vmem:[%s696 + $0x4] sm:$0xf]
        %v2126 = vld [vmem:[%s696 + $0x8] sm:$0xf]
        %v2127 = vld [vmem:[%s696 + $0xc] sm:$0xf]
        %v2128 = vld [vmem:[%s696 + $0x10] sm:$0xf]
        %v2129 = vld [vmem:[%s696 + $0x14] sm:$0xf]
        %v2130 = vld [vmem:[%s696 + $0x18] sm:$0xf]
        %v2131 = vld [vmem:[%s696 + $0x1c] sm:$0xf]
        %v2132 = vld [vmem:[%s696 + $0x20] sm:$0xf]
        %v2133 = vld [vmem:[%s696 + $0x24] sm:$0xf]
        %v2134 = vld [vmem:[%s696 + $0x28] sm:$0xf]
        %v2135 = vld [vmem:[%s696 + $0x2c] sm:$0xf]
        %v2136 = vld [vmem:[%s696 + $0x30] sm:$0xf]
        %v2137 = vld [vmem:[%s696 + $0x34] sm:$0xf]
        %v2138 = vld [vmem:[%s696 + $0x38] sm:$0xf]
        %v2139 = vld [vmem:[%s696 + $0x3c] sm:$0xf]
        %v2140 = vld [vmem:[%s696 + $0x40] sm:$0xf]
        %v2141 = vld [vmem:[%s696 + $0x44] sm:$0xf]
        %v2142 = vld [vmem:[%s696 + $0x48] sm:$0xf]
        %v2143 = vld [vmem:[%s696 + $0x4c] sm:$0xf]
        %v2144 = vld [vmem:[%s696 + $0x50] sm:$0xf]
        %v2145 = vld [vmem:[%s696 + $0x54] sm:$0xf]
        %v2146 = vld [vmem:[%s696 + $0x58] sm:$0xf]
        %v2147 = vld [vmem:[%s696 + $0x5c] sm:$0xf]
        %v2148 = vld [vmem:[%s696 + $0x60] sm:$0xf]
        %v2149 = vld [vmem:[%s696 + $0x64] sm:$0xf]
        %v2150 = vld [vmem:[%s696 + $0x68] sm:$0xf]
        %v2151 = vld [vmem:[%s696 + $0x6c] sm:$0xf]
        %v2152 = vld [vmem:[%s696 + $0x70] sm:$0xf]
        %v2153 = vld [vmem:[%s696 + $0x74] sm:$0xf]
        %v2154 = vld [vmem:[%s696 + $0x78] sm:$0xf]
        %v2155 = vld [vmem:[%s696 + $0x7c] sm:$0xf]
        %v2156 = vld [vmem:[%s699] sm:$0x1]
        %v2158 = vlaneseq
        %v2159 = vshrl.u32 %v2158, 7
        %v2160 = vsub.s32 0, %v2159
        %v2161 = vrot.slane %v2156, %v2160
        %v2195 = vunpack.c.l.b16 %v2124
        %v2196 = vunpack.c.l.b16 %v2125
        %v2197 = vunpack.c.l.b16 %v2126
        %v2198 = vunpack.c.l.b16 %v2127
        %v2199 = vunpack.c.l.b16 %v2128
        %v2200 = vunpack.c.l.b16 %v2129
        %v2201 = vunpack.c.l.b16 %v2130
        %v2202 = vunpack.c.l.b16 %v2131
        %v2203 = vunpack.c.l.b16 %v2132
        %v2204 = vunpack.c.l.b16 %v2133
        %v2205 = vunpack.c.l.b16 %v2134
        %v2206 = vunpack.c.l.b16 %v2135
        %v2207 = vunpack.c.l.b16 %v2136
        %v2208 = vunpack.c.l.b16 %v2137
        %v2209 = vunpack.c.l.b16 %v2138
        %v2210 = vunpack.c.l.b16 %v2139
        %v2211 = vunpack.c.l.b16 %v2140
        %v2212 = vunpack.c.l.b16 %v2141
        %v2213 = vunpack.c.l.b16 %v2142
        %v2214 = vunpack.c.l.b16 %v2143
        %v2215 = vunpack.c.l.b16 %v2144
        %v2216 = vunpack.c.l.b16 %v2145
        %v2217 = vunpack.c.l.b16 %v2146
        %v2218 = vunpack.c.l.b16 %v2147
        %v2219 = vunpack.c.l.b16 %v2148
        %v2220 = vunpack.c.l.b16 %v2149
        %v2221 = vunpack.c.l.b16 %v2150
        %v2222 = vunpack.c.l.b16 %v2151
        %v2223 = vunpack.c.l.b16 %v2152
        %v2224 = vunpack.c.l.b16 %v2153
        %v2225 = vunpack.c.l.b16 %v2154
        %v2226 = vunpack.c.l.b16 %v2155
        %v2227 = vpack.c.b16 %v2196, %v2195
        %v2228 = vpack.c.b16 %v2198, %v2197
        %v2229 = vpack.c.b16 %v2200, %v2199
        %v2230 = vpack.c.b16 %v2202, %v2201
        %v2231 = vpack.c.b16 %v2204, %v2203
        %v2232 = vpack.c.b16 %v2206, %v2205
        %v2233 = vpack.c.b16 %v2208, %v2207
        %v2234 = vpack.c.b16 %v2210, %v2209
        %v2235 = vpack.c.b16 %v2212, %v2211
        %v2236 = vpack.c.b16 %v2214, %v2213
        %v2237 = vpack.c.b16 %v2216, %v2215
        %v2238 = vpack.c.b16 %v2218, %v2217
        %v2239 = vpack.c.b16 %v2220, %v2219
        %v2240 = vpack.c.b16 %v2222, %v2221
        %v2241 = vpack.c.b16 %v2224, %v2223
        %v2242 = vpack.c.b16 %v2226, %v2225
        %2259 = vmatprep.subr.bf16.mxu0 0
        %2260 = vmatpush1.bf16.msra.mxu0 %v2227
        %2261 = vmatprep.subr.bf16.mxu0 0
        %2262 = vmatpush1.bf16.msra.mxu0 %v2228
        %2263 = vmatprep.subr.bf16.mxu0 0
        %2264 = vmatpush1.bf16.msra.mxu0 %v2229
        %2265 = vmatprep.subr.bf16.mxu0 0
        %2266 = vmatpush1.bf16.msra.mxu0 %v2230
        %2267 = vmatprep.subr.bf16.mxu0 0
        %2268 = vmatpush1.bf16.msra.mxu0 %v2231
        %2269 = vmatprep.subr.bf16.mxu0 0
        %2270 = vmatpush1.bf16.msra.mxu0 %v2232
        %2271 = vmatprep.subr.bf16.mxu0 0
        %2272 = vmatpush1.bf16.msra.mxu0 %v2233
        %2273 = vmatprep.subr.bf16.mxu0 0
        %2274 = vmatpush1.bf16.msra.mxu0 %v2234
        %2275 = vmatprep.subr.bf16.mxu0 0
        %2276 = vmatpush1.bf16.msra.mxu0 %v2235
        %2277 = vmatprep.subr.bf16.mxu0 0
        %2278 = vmatpush1.bf16.msra.mxu0 %v2236
        %2279 = vmatprep.subr.bf16.mxu0 0
        %2280 = vmatpush1.bf16.msra.mxu0 %v2237
        %2281 = vmatprep.subr.bf16.mxu0 0
        %2282 = vmatpush1.bf16.msra.mxu0 %v2238
        %2283 = vmatprep.subr.bf16.mxu0 0
        %2284 = vmatpush1.bf16.msra.mxu0 %v2239
        %2285 = vmatprep.subr.bf16.mxu0 0
        %2286 = vmatpush1.bf16.msra.mxu0 %v2240
        %2287 = vmatprep.subr.bf16.mxu0 0
        %2288 = vmatpush1.bf16.msra.mxu0 %v2241
        %2289 = vmatprep.subr.bf16.mxu0 0
        %2290 = vmatpush1.bf16.msra.mxu0 %v2242
        %2291 = vmatprep.mubr.bf16.mxu0 %v2123
        %2292 = vmatmul.mubr.bf16.gmra.mrb[0].mxu0 %v2122
        %v2293 = vpop.f32.mrb[0].mxu0
        %v2294 = vadd.f32 %v2161, %v2293
        %v2295 = vpop.f32.mrb[0].mxu0
        %v2296 = vpop.f32.mrb[0].mxu0
        %v2297 = vpop.f32.mrb[0].mxu0
        %2298 = vdwg.mxu0
        %v2299 = vadd.f32 %v1971, %v2294
        %p2300 = scmp.lt.s32.totalorder %s34, 1
        // Predicated region
        $region85: #{tpu_custom_call.1} parent=79 // pred_check
          %p2301 = pneg %p2300
        $region86: #{tpu_custom_call.1} parent=79 // pred_check_branch
          %2303 = sbr.rel (%p2301) target = $region88
        $region87: #{tpu_custom_call.1} parent=79 // pred_region
          %2304 = vst.msk [vmem:[%s649] sm:$0xff] %vm711, %v2299
        $region88: #{tpu_custom_call.1} parent=79 // pred_fallthru
          _
        %p2305 = scmp.eq.s32.totalorder %s34, 1
        // Predicated region
        $region89: #{tpu_custom_call.1} parent=79 // pred_check
          %p2306 = pneg %p2305
        $region90: #{tpu_custom_call.1} parent=79 // pred_check_branch
          %2308 = sbr.rel (%p2306) target = $region92
        $region91: #{tpu_custom_call.1} parent=79 // pred_region
          %v2309 = vld [vmem:[%s13] sm:$0x1]
          %v2310 = vld [vmem:[%s14] sm:$0x1]
          %v2311 = vsel %vm711, %v2299, 0.0
          %2312 = vadd.xlane.f32.xlu0 %v2311
          %v2313 = vpop.xlane.xlu0 %2312
          %v2314 = vmul.f32 %v2313, %v715
          %v2315 = vsub.f32 %v2299, %v2314
          %v2316 = vmul.f32 %v2315, %v2315
          %v2317 = vsel %vm711, %v2316, 0.0
          %2318 = vadd.xlane.f32.xlu0 %v2317
          %v2319 = vpop.xlane.xlu0 %2318
          %v2320 = vmul.f32 %v2319, %v715
          %v2321 = vadd.f32 %v2320, 1e-05
          %v2322 = vrsqrt.pop %v2321
          %v2323 = vmul.f32 %v2315, %v2322
          %v2325 = vlaneseq
          %v2326 = vshrl.u32 %v2325, 7
          %v2327 = vsub.s32 0, %v2326
          %v2328 = vrot.slane %v2309, %v2327
          %v2330 = vmul.f32 %v2323, %v2328
          %v2332 = vlaneseq
          %v2333 = vshrl.u32 %v2332, 7
          %v2334 = vsub.s32 0, %v2333
          %v2335 = vrot.slane %v2310, %v2334
          %v2337 = vadd.f32 %v2330, %v2335
          %2338 = vst.msk [vmem:[%s649] sm:$0xff] %vm711, %v2337
        $region92: #{tpu_custom_call.1} parent=79 // pred_fallthru
          _
        %s2339 = sand.u32 %s429, 1
        %s2340 = scalar_lea.sflag [#allocation3], %s2339
        %s2341 = sand.u32 %s429, 1
        %s2342 = smul.addr %s2341, 8
        %s2343 = scalar_lea.vmem [#allocation2], %s2342
        // Predicated region
        $region93: #{tpu_custom_call.1} parent=79 // pred_check
          %p2344 = pneg %p439
        $region94: #{tpu_custom_call.1} parent=79 // pred_check_branch
          %2346 = sbr.rel (%p2344) target = $region96
        $region95: #{tpu_custom_call.1} parent=79 // pred_region
          %s2348 = ssub.s32 128, 128
          %2349 = vsyncadd %s2340, %s2348
          %s2350 = smul.addr %s33, 128
          %s2351 = scalar_lea.hbm %s15, %s2350
          %s2353 = sshll.u32 %s2343, 4
          %s2354 = int_to_ptr.vmem [resolvable:$true] %s2353
          %2356 = dma.vmem_to_hbm [thread:$0]  %s2354, 128, %s2351, %s2340
        $region96: #{tpu_custom_call.1} parent=79 // pred_fallthru
          _
      $region80: #{tpu_custom_call.1} parent=5 // pred_fallthru
        _
      %p2357 = scmp.le.s32.totalorder 2, %s24
      // Predicated region
      $region97: #{tpu_custom_call.1} parent=5 // pred_check
        %p2358 = pneg %p2357
      $region98: #{tpu_custom_call.1} parent=5 // pred_check_branch
        %2360 = sbr.rel (%p2358) target = $region100
      $region99: #{tpu_custom_call.1} parent=5 // pred_region
        %s2361 = ssub.s32 %s24, 2
        // Predicated region
        $region101: #{tpu_custom_call.1} parent=99 // pred_check
          %p2362 = pneg %p445
        $region102: #{tpu_custom_call.1} parent=99 // pred_check_branch
          %2364 = sbr.rel (%p2362) target = $region104
        $region103: #{tpu_custom_call.1} parent=99 // pred_region
          %s2365 = sand.u32 %s430, 1
          %s2366 = scalar_lea.sflag [#allocation3], %s2365
          %s2367 = sand.u32 %s430, 1
          %s2368 = smul.addr %s2367, 8
          %s2369 = scalar_lea.vmem [#allocation2], %s2368
          %2370 = dma.done %s2366, 128
        $region104: #{tpu_custom_call.1} parent=99 // pred_fallthru
          _
      $region100: #{tpu_custom_call.1} parent=5 // pred_fallthru
        _
    $region6: #{tpu_custom_call.1} parent=1 // loop_footer
      %s28 = sadd.s32 1, %s24
    $region7: #{tpu_custom_call.1} parent=1 // loop_footer_branch
      %23 = sbr.rel target = $region3
    $region8: #{tpu_custom_call.1} parent=1 // loop_exit
      _
    %2371 = vsyncpa [#allocation3], 1
    %s2372 = scalar_lea.sflag [#allocation3], 1
    %2373 = vsyncpa %s2372, 1

</llo_original>
